<compile_context>
chip_gen: v5e
topology: v5e:2x2
jax: 0.10.0
libtpu: 0.0.40
codegen_flags: <defaults>
</compile_context>

<pallas_src>
import functools

import jax
import jax.numpy as jnp
from jax.experimental import pallas as pl
from jax.experimental.pallas import tpu as pltpu

_LANE = 128            # vreg lane width
_SUBLANE_BF16 = 16     # bf16 sublane packing (2 rows per f32 sublane)
_MAX_BATCH_TILE = 512  # amortizes per-grid-step overhead on v6e/v7x
_MIN_SPLIT_ROWS = 128  # only split into >=2 grid steps if each keeps >=128 rows


def _cdiv(a, b):
    return -(-a // b)


def _round_up(x, m):
    return ((x + m - 1) // m) * m


def _leaky_relu(x, negative_slope=0.2):
    # max(x, a*x) == LeakyReLU for slope < 1; single VALU max per element.
    return jnp.maximum(x, negative_slope * x)


def _vmem_capacity_bytes():
    try:
        return int(pltpu.get_tpu_info().vmem_capacity_bytes)
    except Exception:
        return 64 * 1024 * 1024  # conservative default (v7x per-core VMEM)


def _mlp_kernel(x_ref,
                w1_ref, b1_ref,
                w2_ref, b2_ref,
                w3_ref, b3_ref,
                w4_ref, b4_ref,
                out_ref):
    """Whole MLP forward for one batch tile, resident in VMEM.

    Matmuls run on the MXU with bf16 operands and f32 accumulation; bias adds
    and LeakyReLU run on the VPU in f32.
    """
    # Layer 1: (bt, D_pad) @ (D_pad, 512) + (1, 512)   -- x already bf16
    h = jnp.dot(x_ref[...], w1_ref[...], preferred_element_type=jnp.float32)
    h = _leaky_relu(h + b1_ref[...])

    # Layer 2: (bt, 512) @ (512, 512) + (1, 512)
    h = jnp.dot(h.astype(jnp.bfloat16), w2_ref[...],
                preferred_element_type=jnp.float32)
    h = _leaky_relu(h + b2_ref[...])

    # Layer 3: (bt, 512) @ (512, 128) + (1, 128)
    h = jnp.dot(h.astype(jnp.bfloat16), w3_ref[...],
                preferred_element_type=jnp.float32)
    h = _leaky_relu(h + b3_ref[...])

    # Layer 4 (logits, no activation): (bt, 128) @ (128, C_pad) + (1, C_pad)
    out = jnp.dot(h.astype(jnp.bfloat16), w4_ref[...],
                  preferred_element_type=jnp.float32)
    out_ref[...] = (out + b4_ref[...]).astype(out_ref.dtype)


def _pick_batch_tile(b_pad):
    # Small batches: single tile (b_pad is already a multiple of 16).
    # Medium batches: exactly 2 steps so both v7x TensorCores get work.
    # Large batches: fixed 512-row tiles -> pipelined multi-step grid.
    if b_pad <= 2 * _MIN_SPLIT_ROWS:
        return b_pad
    return min(_MAX_BATCH_TILE, _round_up(_cdiv(b_pad, 2), _SUBLANE_BF16))


@functools.partial(jax.jit,
                   static_argnames=("batch_tile", "single_buffer_weights"))
def classifier_forward(x, params, *, batch_tile=None, single_buffer_weights=True):
    """Run the Classifier MLP forward pass with a Pallas TPU kernel.

    x: (B, input_length) float32
    params: dict w1..w4 (in, out), b1..b4 (1, out)
    """
    w1, b1 = params["w1"], params["b1"]
    w2, b2 = params["w2"], params["b2"]
    w3, b3 = params["w3"], params["b3"]
    w4, b4 = params["w4"], params["b4"]

    B, d_in = x.shape
    classes = w4.shape[1]

    din_pad = _round_up(d_in, _LANE)      # lane-dense first matmul K
    c_pad = _round_up(classes, _LANE)     # lane-dense logits
    b_pad = _round_up(B, _SUBLANE_BF16)   # bf16 sublane alignment only

    if batch_tile is None:
        bt = _pick_batch_tile(b_pad)
    else:
        bt = min(_round_up(batch_tile, _SUBLANE_BF16), b_pad)
    grid = (_cdiv(b_pad, bt),)            # boundary block (if any) is masked

    # x stream in bf16 (MXU-native); padding fuses with the dtype convert,
    # so no separate full-array pad pass. No batch padding beyond 16 rows.
    x_p = x.astype(jnp.bfloat16)
    if b_pad != B or din_pad != d_in:
        x_p = jnp.pad(x_p, ((0, b_pad - B), (0, din_pad - d_in)))

    # bf16 weights for the MXU; f32 biases for the VPU epilogue.
    w1b, w2b, w3b, w4b = (w.astype(jnp.bfloat16) for w in (w1, w2, w3, w4))
    b1f, b2f, b3f, b4f = (b.astype(jnp.float32) for b in (b1, b2, b3, b4))
    if din_pad != d_in:
        w1b = jnp.pad(w1b, ((0, din_pad - d_in), (0, 0)))
    if c_pad != classes:
        w4b = jnp.pad(w4b, ((0, 0), (0, c_pad - classes)))
        b4f = jnp.pad(b4f, ((0, 0), (0, c_pad - classes)))

    # TODO(synk): for very large input_length (d_in >~ 8-16K) add a K-tiled
    # grid axis (f32 accumulator, "arbitrary" semantics) or pl.ANY + manual
    # DMA for w1 so the bf16 weight need not be fully VMEM-resident on v7x.

    # Weight / bias blocks are identical for every grid step -> single buffer.
    use_single_buffer = single_buffer_weights and hasattr(pl, "Buffered")

    def _const_spec(shape):
        index_map = lambda i: (0,) * len(shape)
        if use_single_buffer:
            return pl.BlockSpec(shape, index_map, pipeline_mode=pl.Buffered(1))
        return pl.BlockSpec(shape, index_map)

    # VMEM budget: double-buffered x/out tiles + weight/bias blocks + f32
    # intermediates; clamp with per-generation headroom (v7x: 64 MiB VMEM).
    w_bytes = 2 * (din_pad * 512 + 512 * 512 + 512 * 128 + 128 * c_pad)  # bf16
    b_bytes = 4 * (512 + 512 + 128 + c_pad)
    tile_bytes = 2 * bt * din_pad * 2 + 2 * bt * c_pad * 4
    act_bytes = 4 * bt * 512 * 4
    weight_copies = 1 if use_single_buffer else 2
    vmem_needed = tile_bytes + weight_copies * (w_bytes + b_bytes) + act_bytes
    vmem_cap = _vmem_capacity_bytes()
    vmem_limit = int(min(max(2 * vmem_needed, 32 * 1024 * 1024),
                         vmem_cap - 12 * 1024 * 1024))

    flops = 2 * b_pad * (din_pad * 512 + 512 * 512 + 512 * 128 + 128 * c_pad)
    bytes_accessed = (b_pad * din_pad * 2          # x (bf16)
                      + b_pad * c_pad * 4          # logits out (f32)
                      + w_bytes + b_bytes)

    out = pl.pallas_call(
        _mlp_kernel,
        out_shape=jax.ShapeDtypeStruct((b_pad, c_pad), jnp.float32),
        grid_spec=pltpu.PrefetchScalarGridSpec(
            num_scalar_prefetch=0,
            grid=grid,
            in_specs=[
                pl.BlockSpec((bt, din_pad), lambda i: (i, 0)),   # x tile
                _const_spec(w1b.shape), _const_spec(b1f.shape),
                _const_spec(w2b.shape), _const_spec(b2f.shape),
                _const_spec(w3b.shape), _const_spec(b3f.shape),
                _const_spec(w4b.shape), _const_spec(b4f.shape),
            ],
            out_specs=pl.BlockSpec((bt, c_pad), lambda i: (i, 0)),
        ),
        compiler_params=pltpu.CompilerParams(
            dimension_semantics=("parallel",),
            vmem_limit_bytes=vmem_limit,
        ),
        cost_estimate=pl.CostEstimate(
            flops=flops, transcendentals=0, bytes_accessed=bytes_accessed),
    )(x_p, w1b, b1f, w2b, b2f, w3b, b3f, w4b, b4f)

    return out[:B, :classes]


def init_params(key, input_length, classes_count):
    """nn.Linear-style init: U(-1/sqrt(fan_in), 1/sqrt(fan_in))."""
    dims = [(input_length, 512), (512, 512), (512, 128), (128, classes_count)]
    params = {}
    keys = jax.random.split(key, 2 * len(dims))
    for idx, (fan_in, fan_out) in enumerate(dims):
        bound = 1.0 / jnp.sqrt(jnp.float32(fan_in))
        w = jax.random.uniform(keys[2 * idx], (fan_in, fan_out),
                               minval=-bound, maxval=bound, dtype=jnp.float32)
        b = jax.random.uniform(keys[2 * idx + 1], (1, fan_out),
                               minval=-bound, maxval=bound, dtype=jnp.float32)
        params[f"w{idx + 1}"] = w
        params[f"b{idx + 1}"] = b
    return params


def _reference_forward(x, params):
    h = x
    for i in range(1, 4):
        h = h @ params[f"w{i}"] + params[f"b{i}"]
        h = jnp.where(h > 0, h, 0.2 * h)
    return h @ params["w4"] + params["b4"]


if __name__ == "__main__":
    key = jax.random.PRNGKey(0)
    k_params, k_x = jax.random.split(key)

    batch = 8
    input_length = 32
    classes_count = 10

    params = init_params(k_params, input_length, classes_count)
    x = jax.random.normal(k_x, (batch, input_length), dtype=jnp.float32)

    out = jax.block_until_ready(classifier_forward(x, params))

    ref = _reference_forward(x, params)
    assert out.shape == (batch, classes_count), out.shape
    # bf16 matmul operands (f32 accumulation) -> looser tolerance vs f32 ref.
    assert jnp.allclose(out, ref, atol=5e-2, rtol=5e-2), float(
        jnp.max(jnp.abs(out - ref)))

    print("KERNEL_OK")
</pallas_src>

<mosaic_0001>
module attributes {stable_mosaic.version = 11 : i64} {
  func.func @_mlp_kernel(%arg0: i32, %arg1: memref<16x128xbf16, #tpu.memory_space<vmem>>, %arg2: memref<128x512xbf16, #tpu.memory_space<vmem>>, %arg3: memref<1x512xf32, #tpu.memory_space<vmem>>, %arg4: memref<512x512xbf16, #tpu.memory_space<vmem>>, %arg5: memref<1x512xf32, #tpu.memory_space<vmem>>, %arg6: memref<512x128xbf16, #tpu.memory_space<vmem>>, %arg7: memref<1x128xf32, #tpu.memory_space<vmem>>, %arg8: memref<128x128xbf16, #tpu.memory_space<vmem>>, %arg9: memref<1x128xf32, #tpu.memory_space<vmem>>, %arg10: memref<16x128xf32, #tpu.memory_space<vmem>>) attributes {dimension_semantics = [#tpu.dimension_semantics<parallel>], iteration_bounds = array<i64: 1>, scalar_prefetch = 0 : i64, scratch_operands = 0 : i64, tpu.core_type = #tpu.core_type<tc>, window_params = [{transform_indices = @transform_0, window_bounds = array<i64: 16, 128>}, {pipeline_mode = #tpu.pipeline_mode<synchronous>, transform_indices = @transform_1, window_bounds = array<i64: 128, 512>}, {pipeline_mode = #tpu.pipeline_mode<synchronous>, transform_indices = @transform_2, window_bounds = array<i64: 1, 512>}, {pipeline_mode = #tpu.pipeline_mode<synchronous>, transform_indices = @transform_3, window_bounds = array<i64: 512, 512>}, {pipeline_mode = #tpu.pipeline_mode<synchronous>, transform_indices = @transform_4, window_bounds = array<i64: 1, 512>}, {pipeline_mode = #tpu.pipeline_mode<synchronous>, transform_indices = @transform_5, window_bounds = array<i64: 512, 128>}, {pipeline_mode = #tpu.pipeline_mode<synchronous>, transform_indices = @transform_6, window_bounds = array<i64: 1, 128>}, {pipeline_mode = #tpu.pipeline_mode<synchronous>, transform_indices = @transform_7, window_bounds = array<i64: 128, 128>}, {pipeline_mode = #tpu.pipeline_mode<synchronous>, transform_indices = @transform_8, window_bounds = array<i64: 1, 128>}, {transform_indices = @transform_9, window_bounds = array<i64: 16, 128>}]} {
    %c0 = arith.constant 0 : index
    %c0_0 = arith.constant 0 : index
    %0 = vector.load %arg1[%c0, %c0_0] : memref<16x128xbf16, #tpu.memory_space<vmem>>, vector<16x128xbf16>
    %c0_1 = arith.constant 0 : index
    %c0_2 = arith.constant 0 : index
    %1 = vector.load %arg2[%c0_1, %c0_2] : memref<128x512xbf16, #tpu.memory_space<vmem>>, vector<128x512xbf16>
    %cst = arith.constant dense<0.000000e+00> : vector<16x512xf32>
    %2 = tpu.matmul %0, %1, %cst {dimension_numbers = #tpu.dot_dimension_numbers<[1], [0], [0], [1], [0, 0, 1, 1], [], []>} : vector<16x128xbf16>, vector<128x512xbf16>, vector<16x512xf32> -> vector<16x512xf32>
    %c0_3 = arith.constant 0 : index
    %c0_4 = arith.constant 0 : index
    %3 = vector.load %arg3[%c0_3, %c0_4] : memref<1x512xf32, #tpu.memory_space<vmem>>, vector<1x512xf32>
    %4 = vector.broadcast %3 : vector<1x512xf32> to vector<16x512xf32>
    %5 = arith.addf %2, %4 : vector<16x512xf32>
    %cst_5 = arith.constant 2.000000e-01 : f32
    %6 = vector.broadcast %cst_5 : f32 to vector<16x512xf32>
    %7 = arith.mulf %6, %5 : vector<16x512xf32>
    %8 = arith.maximumf %5, %7 : vector<16x512xf32>
    %9 = arith.truncf %8 : vector<16x512xf32> to vector<16x512xbf16>
    %c0_6 = arith.constant 0 : index
    %c0_7 = arith.constant 0 : index
    %10 = vector.load %arg4[%c0_6, %c0_7] : memref<512x512xbf16, #tpu.memory_space<vmem>>, vector<512x512xbf16>
    %cst_8 = arith.constant dense<0.000000e+00> : vector<16x512xf32>
    %11 = tpu.matmul %9, %10, %cst_8 {dimension_numbers = #tpu.dot_dimension_numbers<[1], [0], [0], [1], [0, 0, 1, 1], [], []>} : vector<16x512xbf16>, vector<512x512xbf16>, vector<16x512xf32> -> vector<16x512xf32>
    %c0_9 = arith.constant 0 : index
    %c0_10 = arith.constant 0 : index
    %12 = vector.load %arg5[%c0_9, %c0_10] : memref<1x512xf32, #tpu.memory_space<vmem>>, vector<1x512xf32>
    %13 = vector.broadcast %12 : vector<1x512xf32> to vector<16x512xf32>
    %14 = arith.addf %11, %13 : vector<16x512xf32>
    %cst_11 = arith.constant 2.000000e-01 : f32
    %15 = vector.broadcast %cst_11 : f32 to vector<16x512xf32>
    %16 = arith.mulf %15, %14 : vector<16x512xf32>
    %17 = arith.maximumf %14, %16 : vector<16x512xf32>
    %18 = arith.truncf %17 : vector<16x512xf32> to vector<16x512xbf16>
    %c0_12 = arith.constant 0 : index
    %c0_13 = arith.constant 0 : index
    %19 = vector.load %arg6[%c0_12, %c0_13] : memref<512x128xbf16, #tpu.memory_space<vmem>>, vector<512x128xbf16>
    %cst_14 = arith.constant dense<0.000000e+00> : vector<16x128xf32>
    %20 = tpu.matmul %18, %19, %cst_14 {dimension_numbers = #tpu.dot_dimension_numbers<[1], [0], [0], [1], [0, 0, 1, 1], [], []>} : vector<16x512xbf16>, vector<512x128xbf16>, vector<16x128xf32> -> vector<16x128xf32>
    %c0_15 = arith.constant 0 : index
    %c0_16 = arith.constant 0 : index
    %21 = vector.load %arg7[%c0_15, %c0_16] : memref<1x128xf32, #tpu.memory_space<vmem>>, vector<1x128xf32>
    %22 = vector.broadcast %21 : vector<1x128xf32> to vector<16x128xf32>
    %23 = arith.addf %20, %22 : vector<16x128xf32>
    %cst_17 = arith.constant 2.000000e-01 : f32
    %24 = vector.broadcast %cst_17 : f32 to vector<16x128xf32>
    %25 = arith.mulf %24, %23 : vector<16x128xf32>
    %26 = arith.maximumf %23, %25 : vector<16x128xf32>
    %27 = arith.truncf %26 : vector<16x128xf32> to vector<16x128xbf16>
    %c0_18 = arith.constant 0 : index
    %c0_19 = arith.constant 0 : index
    %28 = vector.load %arg8[%c0_18, %c0_19] : memref<128x128xbf16, #tpu.memory_space<vmem>>, vector<128x128xbf16>
    %cst_20 = arith.constant dense<0.000000e+00> : vector<16x128xf32>
    %29 = tpu.matmul %27, %28, %cst_20 {dimension_numbers = #tpu.dot_dimension_numbers<[1], [0], [0], [1], [0, 0, 1, 1], [], []>} : vector<16x128xbf16>, vector<128x128xbf16>, vector<16x128xf32> -> vector<16x128xf32>
    %c0_21 = arith.constant 0 : index
    %c0_22 = arith.constant 0 : index
    %30 = vector.load %arg9[%c0_21, %c0_22] : memref<1x128xf32, #tpu.memory_space<vmem>>, vector<1x128xf32>
    %31 = vector.broadcast %30 : vector<1x128xf32> to vector<16x128xf32>
    %32 = arith.addf %29, %31 : vector<16x128xf32>
    %c0_23 = arith.constant 0 : index
    %c0_24 = arith.constant 0 : index
    %33 = vector.load %arg10[%c0_23, %c0_24] : memref<16x128xf32, #tpu.memory_space<vmem>>, vector<16x128xf32>
    tpu.vector_store %arg10[%c0_23, %c0_24], %32 {strides = array<i32>} : memref<16x128xf32, #tpu.memory_space<vmem>>, vector<16x128xf32>,
    return
  }
  func.func @transform_0(%arg0: i32) -> (i32, i32) {
    %c0_i32 = arith.constant 0 : i32
    %c0_i32_0 = arith.constant 0 : i32
    return %arg0, %c0_i32 : i32, i32
  }
  func.func @transform_1(%arg0: i32) -> (i32, i32) {
    %c0_i32 = arith.constant 0 : i32
    %c0_i32_0 = arith.constant 0 : i32
    %c0_i32_1 = arith.constant 0 : i32
    return %c0_i32, %c0_i32_0 : i32, i32
  }
  func.func @transform_2(%arg0: i32) -> (i32, i32) {
    %c0_i32 = arith.constant 0 : i32
    %c0_i32_0 = arith.constant 0 : i32
    %c0_i32_1 = arith.constant 0 : i32
    return %c0_i32, %c0_i32_0 : i32, i32
  }
  func.func @transform_3(%arg0: i32) -> (i32, i32) {
    %c0_i32 = arith.constant 0 : i32
    %c0_i32_0 = arith.constant 0 : i32
    %c0_i32_1 = arith.constant 0 : i32
    return %c0_i32, %c0_i32_0 : i32, i32
  }
  func.func @transform_4(%arg0: i32) -> (i32, i32) {
    %c0_i32 = arith.constant 0 : i32
    %c0_i32_0 = arith.constant 0 : i32
    %c0_i32_1 = arith.constant 0 : i32
    return %c0_i32, %c0_i32_0 : i32, i32
  }
  func.func @transform_5(%arg0: i32) -> (i32, i32) {
    %c0_i32 = arith.constant 0 : i32
    %c0_i32_0 = arith.constant 0 : i32
    %c0_i32_1 = arith.constant 0 : i32
    return %c0_i32, %c0_i32_0 : i32, i32
  }
  func.func @transform_6(%arg0: i32) -> (i32, i32) {
    %c0_i32 = arith.constant 0 : i32
    %c0_i32_0 = arith.constant 0 : i32
    %c0_i32_1 = arith.constant 0 : i32
    return %c0_i32, %c0_i32_0 : i32, i32
  }
  func.func @transform_7(%arg0: i32) -> (i32, i32) {
    %c0_i32 = arith.constant 0 : i32
    %c0_i32_0 = arith.constant 0 : i32
    %c0_i32_1 = arith.constant 0 : i32
    return %c0_i32, %c0_i32_0 : i32, i32
  }
  func.func @transform_8(%arg0: i32) -> (i32, i32) {
    %c0_i32 = arith.constant 0 : i32
    %c0_i32_0 = arith.constant 0 : i32
    %c0_i32_1 = arith.constant 0 : i32
    return %c0_i32, %c0_i32_0 : i32, i32
  }
  func.func @transform_9(%arg0: i32) -> (i32, i32) {
    %c0_i32 = arith.constant 0 : i32
    %c0_i32_0 = arith.constant 0 : i32
    return %arg0, %c0_i32 : i32, i32
  }
}

</mosaic_0001>

<llo_original>
// kernel: classifier_forward.1
$region0: #{classifier_forward.1}
  #allocation0 [shape = 'u32[]', space=smem, size = 0x4, offset = 0x4, fixed_abs, tag = 'smem constant byte address 0x4 - core index']
  #allocation1 [shape = 'u32[72,128]{1,0:T(1,128)}', space=vmem, size = 0x9000, scoped, tag = 'internal scratch']
  %s0 = inlined_call_operand.vmem [shape: bf16[16,128], index: 0, kind: input, shape index: {}]
  %s1 = inlined_call_operand.vmem [shape: bf16[128,512], index: 1, kind: input, shape index: {}]
  %s2 = inlined_call_operand.vmem [shape: f32[1,512], index: 2, kind: input, shape index: {}]
  %s3 = inlined_call_operand.vmem [shape: bf16[512,512], index: 3, kind: input, shape index: {}]
  %s4 = inlined_call_operand.vmem [shape: f32[1,512], index: 4, kind: input, shape index: {}]
  %s5 = inlined_call_operand.vmem [shape: bf16[512,128], index: 5, kind: input, shape index: {}]
  %s6 = inlined_call_operand.vmem [shape: f32[1,128], index: 6, kind: input, shape index: {}]
  %s7 = inlined_call_operand.vmem [shape: bf16[128,128], index: 7, kind: input, shape index: {}]
  %s8 = inlined_call_operand.vmem [shape: f32[1,128], index: 8, kind: input, shape index: {}]
  %s9 = inlined_call_operand.vmem [shape: f32[16,128], index: 9, kind: output, shape index: {}]
  %s10 = sld [smem:[#allocation0]]
  $region46: #{classifier_forward.1} parent=0
    _
  %s12 = ssub.s32 1, %s10
  %s13 = scalar_select 0, %s12, %s10
  // Predicated region
  $region2: #{classifier_forward.1} parent=0 // pred_check
    _
  $region3: #{classifier_forward.1} parent=0 // pred_check_branch
    %15 = sbr.rel (0) target = $region5
  $region4: #{classifier_forward.1} parent=0 // pred_region
    _
  $region5: #{classifier_forward.1} parent=0 // pred_fallthru
    _
  // Predicated region
  $region6: #{classifier_forward.1} parent=0 // pred_check
    _
  $region7: #{classifier_forward.1} parent=0 // pred_check_branch
    %17 = sbr.rel (0) target = $region9
  $region8: #{classifier_forward.1} parent=0 // pred_region
    _
  $region9: #{classifier_forward.1} parent=0 // pred_fallthru
    _
  // Predicated region
  $region10: #{classifier_forward.1} parent=0 // pred_check
    _
  $region11: #{classifier_forward.1} parent=0 // pred_check_branch
    %19 = sbr.rel (0) target = $region13
  $region12: #{classifier_forward.1} parent=0 // pred_region
    _
  $region13: #{classifier_forward.1} parent=0 // pred_fallthru
    _
  // Predicated region
  $region14: #{classifier_forward.1} parent=0 // pred_check
    _
  $region15: #{classifier_forward.1} parent=0 // pred_check_branch
    %21 = sbr.rel (0) target = $region17
  $region16: #{classifier_forward.1} parent=0 // pred_region
    _
  $region17: #{classifier_forward.1} parent=0 // pred_fallthru
    _
  // Predicated region
  $region18: #{classifier_forward.1} parent=0 // pred_check
    _
  $region19: #{classifier_forward.1} parent=0 // pred_check_branch
    %23 = sbr.rel (0) target = $region21
  $region20: #{classifier_forward.1} parent=0 // pred_region
    _
  $region21: #{classifier_forward.1} parent=0 // pred_fallthru
    _
  // Predicated region
  $region22: #{classifier_forward.1} parent=0 // pred_check
    _
  $region23: #{classifier_forward.1} parent=0 // pred_check_branch
    %25 = sbr.rel (0) target = $region25
  $region24: #{classifier_forward.1} parent=0 // pred_region
    _
  $region25: #{classifier_forward.1} parent=0 // pred_fallthru
    _
  // Predicated region
  $region26: #{classifier_forward.1} parent=0 // pred_check
    _
  $region27: #{classifier_forward.1} parent=0 // pred_check_branch
    %27 = sbr.rel (0) target = $region29
  $region28: #{classifier_forward.1} parent=0 // pred_region
    _
  $region29: #{classifier_forward.1} parent=0 // pred_fallthru
    _
  // Predicated region
  $region30: #{classifier_forward.1} parent=0 // pred_check
    _
  $region31: #{classifier_forward.1} parent=0 // pred_check_branch
    %29 = sbr.rel (0) target = $region33
  $region32: #{classifier_forward.1} parent=0 // pred_region
    _
  $region33: #{classifier_forward.1} parent=0 // pred_fallthru
    _
  // Predicated region
  $region34: #{classifier_forward.1} parent=0 // pred_check
    _
  $region35: #{classifier_forward.1} parent=0 // pred_check_branch
    %31 = sbr.rel (0) target = $region37
  $region36: #{classifier_forward.1} parent=0 // pred_region
    _
  $region37: #{classifier_forward.1} parent=0 // pred_fallthru
    _
  %v32 = vld [vmem:[%s0] sm:$0xf]
  %v33 = vld [vmem:[%s0 + $0x4] sm:$0xf]
  %v34 = vld [vmem:[%s1] sm:$0xff]
  %v35 = vld [vmem:[%s1 + $0x8] sm:$0xff]
  %v36 = vld [vmem:[%s1 + $0x10] sm:$0xff]
  %v37 = vld [vmem:[%s1 + $0x18] sm:$0xff]
  %v38 = vld [vmem:[%s1 + $0x20] sm:$0xff]
  %v39 = vld [vmem:[%s1 + $0x28] sm:$0xff]
  %v40 = vld [vmem:[%s1 + $0x30] sm:$0xff]
  %v41 = vld [vmem:[%s1 + $0x38] sm:$0xff]
  %v42 = vld [vmem:[%s1 + $0x40] sm:$0xff]
  %v43 = vld [vmem:[%s1 + $0x48] sm:$0xff]
  %v44 = vld [vmem:[%s1 + $0x50] sm:$0xff]
  %v45 = vld [vmem:[%s1 + $0x58] sm:$0xff]
  %v46 = vld [vmem:[%s1 + $0x60] sm:$0xff]
  %v47 = vld [vmem:[%s1 + $0x68] sm:$0xff]
  %v48 = vld [vmem:[%s1 + $0x70] sm:$0xff]
  %v49 = vld [vmem:[%s1 + $0x78] sm:$0xff]
  %v50 = vld [vmem:[%s1 + $0x80] sm:$0xff]
  %v51 = vld [vmem:[%s1 + $0x88] sm:$0xff]
  %v52 = vld [vmem:[%s1 + $0x90] sm:$0xff]
  %v53 = vld [vmem:[%s1 + $0x98] sm:$0xff]
  %v54 = vld [vmem:[%s1 + $0xa0] sm:$0xff]
  %v55 = vld [vmem:[%s1 + $0xa8] sm:$0xff]
  %v56 = vld [vmem:[%s1 + $0xb0] sm:$0xff]
  %v57 = vld [vmem:[%s1 + $0xb8] sm:$0xff]
  %v58 = vld [vmem:[%s1 + $0xc0] sm:$0xff]
  %v59 = vld [vmem:[%s1 + $0xc8] sm:$0xff]
  %v60 = vld [vmem:[%s1 + $0xd0] sm:$0xff]
  %v61 = vld [vmem:[%s1 + $0xd8] sm:$0xff]
  %v62 = vld [vmem:[%s1 + $0xe0] sm:$0xff]
  %v63 = vld [vmem:[%s1 + $0xe8] sm:$0xff]
  %v64 = vld [vmem:[%s1 + $0xf0] sm:$0xff]
  %v65 = vld [vmem:[%s1 + $0xf8] sm:$0xff]
  %v66 = vld [vmem:[%s2] sm:$0xf]
  %v68 = vperm.slane %v66, 0
  %v69 = vperm.slane %v66, 1
  %v70 = vperm.slane %v66, 2
  %v71 = vperm.slane %v66, 3
  %v78 = vunpack.c.l.b16 %v32
  %v79 = vunpack.c.l.b16 %v33
  %v80 = vpack.c.b16 %v79, %v78
  %v114 = vunpack.c.l.b16 %v34
  %v115 = vunpack.c.h.b16 %v34
  %v116 = vunpack.c.l.b16 %v35
  %v117 = vunpack.c.h.b16 %v35
  %v118 = vunpack.c.l.b16 %v36
  %v119 = vunpack.c.h.b16 %v36
  %v120 = vunpack.c.l.b16 %v37
  %v121 = vunpack.c.h.b16 %v37
  %v122 = vunpack.c.l.b16 %v38
  %v123 = vunpack.c.h.b16 %v38
  %v124 = vunpack.c.l.b16 %v39
  %v125 = vunpack.c.h.b16 %v39
  %v126 = vunpack.c.l.b16 %v40
  %v127 = vunpack.c.h.b16 %v40
  %v128 = vunpack.c.l.b16 %v41
  %v129 = vunpack.c.h.b16 %v41
  %v130 = vunpack.c.l.b16 %v42
  %v131 = vunpack.c.h.b16 %v42
  %v132 = vunpack.c.l.b16 %v43
  %v133 = vunpack.c.h.b16 %v43
  %v134 = vunpack.c.l.b16 %v44
  %v135 = vunpack.c.h.b16 %v44
  %v136 = vunpack.c.l.b16 %v45
  %v137 = vunpack.c.h.b16 %v45
  %v138 = vunpack.c.l.b16 %v46
  %v139 = vunpack.c.h.b16 %v46
  %v140 = vunpack.c.l.b16 %v47
  %v141 = vunpack.c.h.b16 %v47
  %v142 = vunpack.c.l.b16 %v48
  %v143 = vunpack.c.h.b16 %v48
  %v144 = vunpack.c.l.b16 %v49
  %v145 = vunpack.c.h.b16 %v49
  %v146 = vunpack.c.l.b16 %v50
  %v147 = vunpack.c.h.b16 %v50
  %v148 = vunpack.c.l.b16 %v51
  %v149 = vunpack.c.h.b16 %v51
  %v150 = vunpack.c.l.b16 %v52
  %v151 = vunpack.c.h.b16 %v52
  %v152 = vunpack.c.l.b16 %v53
  %v153 = vunpack.c.h.b16 %v53
  %v154 = vunpack.c.l.b16 %v54
  %v155 = vunpack.c.h.b16 %v54
  %v156 = vunpack.c.l.b16 %v55
  %v157 = vunpack.c.h.b16 %v55
  %v158 = vunpack.c.l.b16 %v56
  %v159 = vunpack.c.h.b16 %v56
  %v160 = vunpack.c.l.b16 %v57
  %v161 = vunpack.c.h.b16 %v57
  %v162 = vunpack.c.l.b16 %v58
  %v163 = vunpack.c.h.b16 %v58
  %v164 = vunpack.c.l.b16 %v59
  %v165 = vunpack.c.h.b16 %v59
  %v166 = vunpack.c.l.b16 %v60
  %v167 = vunpack.c.h.b16 %v60
  %v168 = vunpack.c.l.b16 %v61
  %v169 = vunpack.c.h.b16 %v61
  %v170 = vunpack.c.l.b16 %v62
  %v171 = vunpack.c.h.b16 %v62
  %v172 = vunpack.c.l.b16 %v63
  %v173 = vunpack.c.h.b16 %v63
  %v174 = vunpack.c.l.b16 %v64
  %v175 = vunpack.c.h.b16 %v64
  %v176 = vunpack.c.l.b16 %v65
  %v177 = vunpack.c.h.b16 %v65
  %v178 = vpack.c.b16 %v118, %v114
  %v179 = vpack.c.b16 %v119, %v115
  %v180 = vpack.c.b16 %v120, %v116
  %v181 = vpack.c.b16 %v121, %v117
  %v182 = vpack.c.b16 %v126, %v122
  %v183 = vpack.c.b16 %v127, %v123
  %v184 = vpack.c.b16 %v128, %v124
  %v185 = vpack.c.b16 %v129, %v125
  %v186 = vpack.c.b16 %v134, %v130
  %v187 = vpack.c.b16 %v135, %v131
  %v188 = vpack.c.b16 %v136, %v132
  %v189 = vpack.c.b16 %v137, %v133
  %v190 = vpack.c.b16 %v142, %v138
  %v191 = vpack.c.b16 %v143, %v139
  %v192 = vpack.c.b16 %v144, %v140
  %v193 = vpack.c.b16 %v145, %v141
  %v194 = vpack.c.b16 %v150, %v146
  %v195 = vpack.c.b16 %v151, %v147
  %v196 = vpack.c.b16 %v152, %v148
  %v197 = vpack.c.b16 %v153, %v149
  %v198 = vpack.c.b16 %v158, %v154
  %v199 = vpack.c.b16 %v159, %v155
  %v200 = vpack.c.b16 %v160, %v156
  %v201 = vpack.c.b16 %v161, %v157
  %v202 = vpack.c.b16 %v166, %v162
  %v203 = vpack.c.b16 %v167, %v163
  %v204 = vpack.c.b16 %v168, %v164
  %v205 = vpack.c.b16 %v169, %v165
  %v206 = vpack.c.b16 %v174, %v170
  %v207 = vpack.c.b16 %v175, %v171
  %v208 = vpack.c.b16 %v176, %v172
  %v209 = vpack.c.b16 %v177, %v173
  %242 = vmatpush.bf16.msra.mxu0 %v206
  %243 = vmatpush.bf16.msra.mxu0 %v202
  %244 = vmatpush.bf16.msra.mxu0 %v198
  %245 = vmatpush.bf16.msra.mxu0 %v194
  %246 = vmatpush.bf16.msra.mxu0 %v190
  %247 = vmatpush.bf16.msra.mxu0 %v186
  %248 = vmatpush.bf16.msra.mxu0 %v182
  %249 = vmatpush.bf16.msra.mxu0 %v178
  %250 = vmatmul.bf16.gmra.mxu0 %v80
  %v251 = vpop.f32.mrf.mxu0
  %v252 = vadd.f32 %v68, %v251
  %v253 = vpop.f32.mrf.mxu0
  %v254 = vadd.f32 %v68, %v253
  %255 = vdwg.mxu0
  %256 = vmatpush.bf16.msra.mxu0 %v207
  %257 = vmatpush.bf16.msra.mxu0 %v203
  %258 = vmatpush.bf16.msra.mxu0 %v199
  %259 = vmatpush.bf16.msra.mxu0 %v195
  %260 = vmatpush.bf16.msra.mxu0 %v191
  %261 = vmatpush.bf16.msra.mxu0 %v187
  %262 = vmatpush.bf16.msra.mxu0 %v183
  %263 = vmatpush.bf16.msra.mxu0 %v179
  %264 = vmatmul.bf16.gmra.mxu0 %v80
  %v265 = vpop.f32.mrf.mxu0
  %v266 = vadd.f32 %v69, %v265
  %v267 = vpop.f32.mrf.mxu0
  %v268 = vadd.f32 %v69, %v267
  %269 = vdwg.mxu0
  %270 = vmatpush.bf16.msra.mxu0 %v208
  %271 = vmatpush.bf16.msra.mxu0 %v204
  %272 = vmatpush.bf16.msra.mxu0 %v200
  %273 = vmatpush.bf16.msra.mxu0 %v196
  %274 = vmatpush.bf16.msra.mxu0 %v192
  %275 = vmatpush.bf16.msra.mxu0 %v188
  %276 = vmatpush.bf16.msra.mxu0 %v184
  %277 = vmatpush.bf16.msra.mxu0 %v180
  %278 = vmatmul.bf16.gmra.mxu0 %v80
  %v279 = vpop.f32.mrf.mxu0
  %v280 = vadd.f32 %v70, %v279
  %v281 = vpop.f32.mrf.mxu0
  %v282 = vadd.f32 %v70, %v281
  %283 = vdwg.mxu0
  %284 = vmatpush.bf16.msra.mxu0 %v209
  %285 = vmatpush.bf16.msra.mxu0 %v205
  %286 = vmatpush.bf16.msra.mxu0 %v201
  %287 = vmatpush.bf16.msra.mxu0 %v197
  %288 = vmatpush.bf16.msra.mxu0 %v193
  %289 = vmatpush.bf16.msra.mxu0 %v189
  %290 = vmatpush.bf16.msra.mxu0 %v185
  %291 = vmatpush.bf16.msra.mxu0 %v181
  %292 = vmatmul.bf16.gmra.mxu0 %v80
  %v293 = vpop.f32.mrf.mxu0
  %v294 = vadd.f32 %v71, %v293
  %v295 = vpop.f32.mrf.mxu0
  %v296 = vadd.f32 %v71, %v295
  %297 = vdwg.mxu0
  %v298 = vmul.f32 %v252, 0.2
  %v299 = vmul.f32 %v266, 0.2
  %v300 = vmul.f32 %v280, 0.2
  %v301 = vmul.f32 %v294, 0.2
  %v302 = vmul.f32 %v254, 0.2
  %v303 = vmul.f32 %v268, 0.2
  %v304 = vmul.f32 %v282, 0.2
  %v305 = vmul.f32 %v296, 0.2
  %v306 = vmax.f32 %v252, %v298
  %v307 = vmax.f32 %v266, %v299
  %v308 = vmax.f32 %v280, %v300
  %v309 = vmax.f32 %v294, %v301
  %v310 = vmax.f32 %v254, %v302
  %v311 = vmax.f32 %v268, %v303
  %v312 = vmax.f32 %v282, %v304
  %v313 = vmax.f32 %v296, %v305
  %v314 = vpack.c.bf16 %v310, %v306
  %v315 = vpack.c.bf16 %v311, %v307
  %v316 = vpack.c.bf16 %v312, %v308
  %v317 = vpack.c.bf16 %v313, %v309
  %v318 = vld [vmem:[%s3] sm:$0xff]
  %v319 = vld [vmem:[%s3 + $0x8] sm:$0xff]
  %v320 = vld [vmem:[%s3 + $0x10] sm:$0xff]
  %v321 = vld [vmem:[%s3 + $0x18] sm:$0xff]
  %v322 = vld [vmem:[%s3 + $0x20] sm:$0xff]
  %v323 = vld [vmem:[%s3 + $0x28] sm:$0xff]
  %v324 = vld [vmem:[%s3 + $0x30] sm:$0xff]
  %v325 = vld [vmem:[%s3 + $0x38] sm:$0xff]
  %v326 = vld [vmem:[%s3 + $0x40] sm:$0xff]
  %v327 = vld [vmem:[%s3 + $0x48] sm:$0xff]
  %v328 = vld [vmem:[%s3 + $0x50] sm:$0xff]
  %v329 = vld [vmem:[%s3 + $0x58] sm:$0xff]
  %v330 = vld [vmem:[%s3 + $0x60] sm:$0xff]
  %v331 = vld [vmem:[%s3 + $0x68] sm:$0xff]
  %v332 = vld [vmem:[%s3 + $0x70] sm:$0xff]
  %v333 = vld [vmem:[%s3 + $0x78] sm:$0xff]
  %v334 = vld [vmem:[%s3 + $0x80] sm:$0xff]
  %v335 = vld [vmem:[%s3 + $0x88] sm:$0xff]
  %v336 = vld [vmem:[%s3 + $0x90] sm:$0xff]
  %v337 = vld [vmem:[%s3 + $0x98] sm:$0xff]
  %v338 = vld [vmem:[%s3 + $0xa0] sm:$0xff]
  %v339 = vld [vmem:[%s3 + $0xa8] sm:$0xff]
  %v340 = vld [vmem:[%s3 + $0xb0] sm:$0xff]
  %v341 = vld [vmem:[%s3 + $0xb8] sm:$0xff]
  %v342 = vld [vmem:[%s3 + $0xc0] sm:$0xff]
  %v343 = vld [vmem:[%s3 + $0xc8] sm:$0xff]
  %v344 = vld [vmem:[%s3 + $0xd0] sm:$0xff]
  %v345 = vld [vmem:[%s3 + $0xd8] sm:$0xff]
  %v346 = vld [vmem:[%s3 + $0xe0] sm:$0xff]
  %v347 = vld [vmem:[%s3 + $0xe8] sm:$0xff]
  %v348 = vld [vmem:[%s3 + $0xf0] sm:$0xff]
  %v349 = vld [vmem:[%s3 + $0xf8] sm:$0xff]
  %v350 = vld [vmem:[%s3 + $0x100] sm:$0xff]
  %v351 = vld [vmem:[%s3 + $0x108] sm:$0xff]
  %v352 = vld [vmem:[%s3 + $0x110] sm:$0xff]
  %v353 = vld [vmem:[%s3 + $0x118] sm:$0xff]
  %v354 = vld [vmem:[%s3 + $0x120] sm:$0xff]
  %v355 = vld [vmem:[%s3 + $0x128] sm:$0xff]
  %v356 = vld [vmem:[%s3 + $0x130] sm:$0xff]
  %v357 = vld [vmem:[%s3 + $0x138] sm:$0xff]
  %v358 = vld [vmem:[%s3 + $0x140] sm:$0xff]
  %v359 = vld [vmem:[%s3 + $0x148] sm:$0xff]
  %v360 = vld [vmem:[%s3 + $0x150] sm:$0xff]
  %v361 = vld [vmem:[%s3 + $0x158] sm:$0xff]
  %v362 = vld [vmem:[%s3 + $0x160] sm:$0xff]
  %v363 = vld [vmem:[%s3 + $0x168] sm:$0xff]
  %v364 = vld [vmem:[%s3 + $0x170] sm:$0xff]
  %v365 = vld [vmem:[%s3 + $0x178] sm:$0xff]
  %v366 = vld [vmem:[%s3 + $0x180] sm:$0xff]
  %v367 = vld [vmem:[%s3 + $0x188] sm:$0xff]
  %v368 = vld [vmem:[%s3 + $0x190] sm:$0xff]
  %v369 = vld [vmem:[%s3 + $0x198] sm:$0xff]
  %v370 = vld [vmem:[%s3 + $0x1a0] sm:$0xff]
  %v371 = vld [vmem:[%s3 + $0x1a8] sm:$0xff]
  %v372 = vld [vmem:[%s3 + $0x1b0] sm:$0xff]
  %v373 = vld [vmem:[%s3 + $0x1b8] sm:$0xff]
  %v374 = vld [vmem:[%s3 + $0x1c0] sm:$0xff]
  %v375 = vld [vmem:[%s3 + $0x1c8] sm:$0xff]
  %v376 = vld [vmem:[%s3 + $0x1d0] sm:$0xff]
  %v377 = vld [vmem:[%s3 + $0x1d8] sm:$0xff]
  %v378 = vld [vmem:[%s3 + $0x1e0] sm:$0xff]
  %v379 = vld [vmem:[%s3 + $0x1e8] sm:$0xff]
  %v380 = vld [vmem:[%s3 + $0x1f0] sm:$0xff]
  %v381 = vld [vmem:[%s3 + $0x1f8] sm:$0xff]
  %v382 = vld [vmem:[%s3 + $0x200] sm:$0xff]
  %v383 = vld [vmem:[%s3 + $0x208] sm:$0xff]
  %v384 = vld [vmem:[%s3 + $0x210] sm:$0xff]
  %v385 = vld [vmem:[%s3 + $0x218] sm:$0xff]
  %v386 = vld [vmem:[%s3 + $0x220] sm:$0xff]
  %v387 = vld [vmem:[%s3 + $0x228] sm:$0xff]
  %v388 = vld [vmem:[%s3 + $0x230] sm:$0xff]
  %v389 = vld [vmem:[%s3 + $0x238] sm:$0xff]
  %v390 = vld [vmem:[%s3 + $0x240] sm:$0xff]
  %v391 = vld [vmem:[%s3 + $0x248] sm:$0xff]
  %v392 = vld [vmem:[%s3 + $0x250] sm:$0xff]
  %v393 = vld [vmem:[%s3 + $0x258] sm:$0xff]
  %v394 = vld [vmem:[%s3 + $0x260] sm:$0xff]
  %v395 = vld [vmem:[%s3 + $0x268] sm:$0xff]
  %v396 = vld [vmem:[%s3 + $0x270] sm:$0xff]
  %v397 = vld [vmem:[%s3 + $0x278] sm:$0xff]
  %v398 = vld [vmem:[%s3 + $0x280] sm:$0xff]
  %v399 = vld [vmem:[%s3 + $0x288] sm:$0xff]
  %v400 = vld [vmem:[%s3 + $0x290] sm:$0xff]
  %v401 = vld [vmem:[%s3 + $0x298] sm:$0xff]
  %v402 = vld [vmem:[%s3 + $0x2a0] sm:$0xff]
  %v403 = vld [vmem:[%s3 + $0x2a8] sm:$0xff]
  %v404 = vld [vmem:[%s3 + $0x2b0] sm:$0xff]
  %v405 = vld [vmem:[%s3 + $0x2b8] sm:$0xff]
  %v406 = vld [vmem:[%s3 + $0x2c0] sm:$0xff]
  %v407 = vld [vmem:[%s3 + $0x2c8] sm:$0xff]
  %v408 = vld [vmem:[%s3 + $0x2d0] sm:$0xff]
  %v409 = vld [vmem:[%s3 + $0x2d8] sm:$0xff]
  %v410 = vld [vmem:[%s3 + $0x2e0] sm:$0xff]
  %v411 = vld [vmem:[%s3 + $0x2e8] sm:$0xff]
  %v412 = vld [vmem:[%s3 + $0x2f0] sm:$0xff]
  %v413 = vld [vmem:[%s3 + $0x2f8] sm:$0xff]
  %v414 = vld [vmem:[%s3 + $0x300] sm:$0xff]
  %v415 = vld [vmem:[%s3 + $0x308] sm:$0xff]
  %v416 = vld [vmem:[%s3 + $0x310] sm:$0xff]
  %v417 = vld [vmem:[%s3 + $0x318] sm:$0xff]
  %v418 = vld [vmem:[%s3 + $0x320] sm:$0xff]
  %v419 = vld [vmem:[%s3 + $0x328] sm:$0xff]
  %v420 = vld [vmem:[%s3 + $0x330] sm:$0xff]
  %v421 = vld [vmem:[%s3 + $0x338] sm:$0xff]
  %v422 = vld [vmem:[%s3 + $0x340] sm:$0xff]
  %v423 = vld [vmem:[%s3 + $0x348] sm:$0xff]
  %v424 = vld [vmem:[%s3 + $0x350] sm:$0xff]
  %v425 = vld [vmem:[%s3 + $0x358] sm:$0xff]
  %v426 = vld [vmem:[%s3 + $0x360] sm:$0xff]
  %v427 = vld [vmem:[%s3 + $0x368] sm:$0xff]
  %v428 = vld [vmem:[%s3 + $0x370] sm:$0xff]
  %v429 = vld [vmem:[%s3 + $0x378] sm:$0xff]
  %v430 = vld [vmem:[%s3 + $0x380] sm:$0xff]
  %v431 = vld [vmem:[%s3 + $0x388] sm:$0xff]
  %v432 = vld [vmem:[%s3 + $0x390] sm:$0xff]
  %v433 = vld [vmem:[%s3 + $0x398] sm:$0xff]
  %v434 = vld [vmem:[%s3 + $0x3a0] sm:$0xff]
  %v435 = vld [vmem:[%s3 + $0x3a8] sm:$0xff]
  %v436 = vld [vmem:[%s3 + $0x3b0] sm:$0xff]
  %v437 = vld [vmem:[%s3 + $0x3b8] sm:$0xff]
  %v438 = vld [vmem:[%s3 + $0x3c0] sm:$0xff]
  %v439 = vld [vmem:[%s3 + $0x3c8] sm:$0xff]
  %v440 = vld [vmem:[%s3 + $0x3d0] sm:$0xff]
  %v441 = vld [vmem:[%s3 + $0x3d8] sm:$0xff]
  %v442 = vld [vmem:[%s3 + $0x3e0] sm:$0xff]
  %v443 = vld [vmem:[%s3 + $0x3e8] sm:$0xff]
  %v444 = vld [vmem:[%s3 + $0x3f0] sm:$0xff]
  %v445 = vld [vmem:[%s3 + $0x3f8] sm:$0xff]
  %v446 = vld [vmem:[%s4] sm:$0xf]
  %v448 = vperm.slane %v446, 0
  %v449 = vperm.slane %v446, 1
  %v450 = vperm.slane %v446, 2
  %v451 = vperm.slane %v446, 3
  %v584 = vunpack.c.l.b16 %v318
  %v585 = vunpack.c.h.b16 %v318
  %v586 = vunpack.c.l.b16 %v319
  %v587 = vunpack.c.h.b16 %v319
  %v588 = vunpack.c.l.b16 %v320
  %v589 = vunpack.c.h.b16 %v320
  %v590 = vunpack.c.l.b16 %v321
  %v591 = vunpack.c.h.b16 %v321
  %v592 = vunpack.c.l.b16 %v322
  %v593 = vunpack.c.h.b16 %v322
  %v594 = vunpack.c.l.b16 %v323
  %v595 = vunpack.c.h.b16 %v323
  %v596 = vunpack.c.l.b16 %v324
  %v597 = vunpack.c.h.b16 %v324
  %v598 = vunpack.c.l.b16 %v325
  %v599 = vunpack.c.h.b16 %v325
  %v600 = vunpack.c.l.b16 %v326
  %v601 = vunpack.c.h.b16 %v326
  %v602 = vunpack.c.l.b16 %v327
  %v603 = vunpack.c.h.b16 %v327
  %v604 = vunpack.c.l.b16 %v328
  %v605 = vunpack.c.h.b16 %v328
  %v606 = vunpack.c.l.b16 %v329
  %v607 = vunpack.c.h.b16 %v329
  %v608 = vunpack.c.l.b16 %v330
  %v609 = vunpack.c.h.b16 %v330
  %v610 = vunpack.c.l.b16 %v331
  %v611 = vunpack.c.h.b16 %v331
  %v612 = vunpack.c.l.b16 %v332
  %v613 = vunpack.c.h.b16 %v332
  %v614 = vunpack.c.l.b16 %v333
  %v615 = vunpack.c.h.b16 %v333
  %v616 = vunpack.c.l.b16 %v334
  %v617 = vunpack.c.h.b16 %v334
  %v618 = vunpack.c.l.b16 %v335
  %v619 = vunpack.c.h.b16 %v335
  %v620 = vunpack.c.l.b16 %v336
  %v621 = vunpack.c.h.b16 %v336
  %v622 = vunpack.c.l.b16 %v337
  %v623 = vunpack.c.h.b16 %v337
  %v624 = vunpack.c.l.b16 %v338
  %v625 = vunpack.c.h.b16 %v338
  %v626 = vunpack.c.l.b16 %v339
  %v627 = vunpack.c.h.b16 %v339
  %v628 = vunpack.c.l.b16 %v340
  %v629 = vunpack.c.h.b16 %v340
  %v630 = vunpack.c.l.b16 %v341
  %v631 = vunpack.c.h.b16 %v341
  %v632 = vunpack.c.l.b16 %v342
  %v633 = vunpack.c.h.b16 %v342
  %v634 = vunpack.c.l.b16 %v343
  %v635 = vunpack.c.h.b16 %v343
  %v636 = vunpack.c.l.b16 %v344
  %v637 = vunpack.c.h.b16 %v344
  %v638 = vunpack.c.l.b16 %v345
  %v639 = vunpack.c.h.b16 %v345
  %v640 = vunpack.c.l.b16 %v346
  %v641 = vunpack.c.h.b16 %v346
  %v642 = vunpack.c.l.b16 %v347
  %v643 = vunpack.c.h.b16 %v347
  %v644 = vunpack.c.l.b16 %v348
  %v645 = vunpack.c.h.b16 %v348
  %v646 = vunpack.c.l.b16 %v349
  %v647 = vunpack.c.h.b16 %v349
  %v648 = vunpack.c.l.b16 %v350
  %v649 = vunpack.c.h.b16 %v350
  %v650 = vunpack.c.l.b16 %v351
  %v651 = vunpack.c.h.b16 %v351
  %v652 = vunpack.c.l.b16 %v352
  %v653 = vunpack.c.h.b16 %v352
  %v654 = vunpack.c.l.b16 %v353
  %v655 = vunpack.c.h.b16 %v353
  %v656 = vunpack.c.l.b16 %v354
  %v657 = vunpack.c.h.b16 %v354
  %v658 = vunpack.c.l.b16 %v355
  %v659 = vunpack.c.h.b16 %v355
  %v660 = vunpack.c.l.b16 %v356
  %v661 = vunpack.c.h.b16 %v356
  %v662 = vunpack.c.l.b16 %v357
  %v663 = vunpack.c.h.b16 %v357
  %v664 = vunpack.c.l.b16 %v358
  %v665 = vunpack.c.h.b16 %v358
  %v666 = vunpack.c.l.b16 %v359
  %v667 = vunpack.c.h.b16 %v359
  %v668 = vunpack.c.l.b16 %v360
  %v669 = vunpack.c.h.b16 %v360
  %v670 = vunpack.c.l.b16 %v361
  %v671 = vunpack.c.h.b16 %v361
  %v672 = vunpack.c.l.b16 %v362
  %v673 = vunpack.c.h.b16 %v362
  %v674 = vunpack.c.l.b16 %v363
  %v675 = vunpack.c.h.b16 %v363
  %v676 = vunpack.c.l.b16 %v364
  %v677 = vunpack.c.h.b16 %v364
  %v678 = vunpack.c.l.b16 %v365
  %v679 = vunpack.c.h.b16 %v365
  %v680 = vunpack.c.l.b16 %v366
  %v681 = vunpack.c.h.b16 %v366
  %v682 = vunpack.c.l.b16 %v367
  %v683 = vunpack.c.h.b16 %v367
  %v684 = vunpack.c.l.b16 %v368
  %v685 = vunpack.c.h.b16 %v368
  %v686 = vunpack.c.l.b16 %v369
  %v687 = vunpack.c.h.b16 %v369
  %v688 = vunpack.c.l.b16 %v370
  %v689 = vunpack.c.h.b16 %v370
  %v690 = vunpack.c.l.b16 %v371
  %v691 = vunpack.c.h.b16 %v371
  %v692 = vunpack.c.l.b16 %v372
  %v693 = vunpack.c.h.b16 %v372
  %v694 = vunpack.c.l.b16 %v373
  %v695 = vunpack.c.h.b16 %v373
  %v696 = vunpack.c.l.b16 %v374
  %v697 = vunpack.c.h.b16 %v374
  %v698 = vunpack.c.l.b16 %v375
  %v699 = vunpack.c.h.b16 %v375
  %v700 = vunpack.c.l.b16 %v376
  %v701 = vunpack.c.h.b16 %v376
  %v702 = vunpack.c.l.b16 %v377
  %v703 = vunpack.c.h.b16 %v377
  %v704 = vunpack.c.l.b16 %v378
  %v705 = vunpack.c.h.b16 %v378
  %v706 = vunpack.c.l.b16 %v379
  %v707 = vunpack.c.h.b16 %v379
  %v708 = vunpack.c.l.b16 %v380
  %v709 = vunpack.c.h.b16 %v380
  %v710 = vunpack.c.l.b16 %v381
  %v711 = vunpack.c.h.b16 %v381
  %v712 = vunpack.c.l.b16 %v382
  %v713 = vunpack.c.h.b16 %v382
  %v714 = vunpack.c.l.b16 %v383
  %v715 = vunpack.c.h.b16 %v383
  %v716 = vunpack.c.l.b16 %v384
  %v717 = vunpack.c.h.b16 %v384
  %v718 = vunpack.c.l.b16 %v385
  %v719 = vunpack.c.h.b16 %v385
  %v720 = vunpack.c.l.b16 %v386
  %v721 = vunpack.c.h.b16 %v386
  %v722 = vunpack.c.l.b16 %v387
  %v723 = vunpack.c.h.b16 %v387
  %v724 = vunpack.c.l.b16 %v388
  %v725 = vunpack.c.h.b16 %v388
  %v726 = vunpack.c.l.b16 %v389
  %v727 = vunpack.c.h.b16 %v389
  %v728 = vunpack.c.l.b16 %v390
  %v729 = vunpack.c.h.b16 %v390
  %v730 = vunpack.c.l.b16 %v391
  %v731 = vunpack.c.h.b16 %v391
  %v732 = vunpack.c.l.b16 %v392
  %v733 = vunpack.c.h.b16 %v392
  %v734 = vunpack.c.l.b16 %v393
  %v735 = vunpack.c.h.b16 %v393
  %v736 = vunpack.c.l.b16 %v394
  %v737 = vunpack.c.h.b16 %v394
  %v738 = vunpack.c.l.b16 %v395
  %v739 = vunpack.c.h.b16 %v395
  %v740 = vunpack.c.l.b16 %v396
  %v741 = vunpack.c.h.b16 %v396
  %v742 = vunpack.c.l.b16 %v397
  %v743 = vunpack.c.h.b16 %v397
  %v744 = vunpack.c.l.b16 %v398
  %v745 = vunpack.c.h.b16 %v398
  %v746 = vunpack.c.l.b16 %v399
  %v747 = vunpack.c.h.b16 %v399
  %v748 = vunpack.c.l.b16 %v400
  %v749 = vunpack.c.h.b16 %v400
  %v750 = vunpack.c.l.b16 %v401
  %v751 = vunpack.c.h.b16 %v401
  %v752 = vunpack.c.l.b16 %v402
  %v753 = vunpack.c.h.b16 %v402
  %v754 = vunpack.c.l.b16 %v403
  %v755 = vunpack.c.h.b16 %v403
  %v756 = vunpack.c.l.b16 %v404
  %v757 = vunpack.c.h.b16 %v404
  %v758 = vunpack.c.l.b16 %v405
  %v759 = vunpack.c.h.b16 %v405
  %v760 = vunpack.c.l.b16 %v406
  %v761 = vunpack.c.h.b16 %v406
  %v762 = vunpack.c.l.b16 %v407
  %v763 = vunpack.c.h.b16 %v407
  %v764 = vunpack.c.l.b16 %v408
  %v765 = vunpack.c.h.b16 %v408
  %v766 = vunpack.c.l.b16 %v409
  %v767 = vunpack.c.h.b16 %v409
  %v768 = vunpack.c.l.b16 %v410
  %v769 = vunpack.c.h.b16 %v410
  %v770 = vunpack.c.l.b16 %v411
  %v771 = vunpack.c.h.b16 %v411
  %v772 = vunpack.c.l.b16 %v412
  %v773 = vunpack.c.h.b16 %v412
  %v774 = vunpack.c.l.b16 %v413
  %v775 = vunpack.c.h.b16 %v413
  %v776 = vunpack.c.l.b16 %v414
  %v777 = vunpack.c.h.b16 %v414
  %v778 = vunpack.c.l.b16 %v415
  %v779 = vunpack.c.h.b16 %v415
  %v780 = vunpack.c.l.b16 %v416
  %v781 = vunpack.c.h.b16 %v416
  %v782 = vunpack.c.l.b16 %v417
  %v783 = vunpack.c.h.b16 %v417
  %v784 = vunpack.c.l.b16 %v418
  %v785 = vunpack.c.h.b16 %v418
  %v786 = vunpack.c.l.b16 %v419
  %v787 = vunpack.c.h.b16 %v419
  %v788 = vunpack.c.l.b16 %v420
  %v789 = vunpack.c.h.b16 %v420
  %v790 = vunpack.c.l.b16 %v421
  %v791 = vunpack.c.h.b16 %v421
  %v792 = vunpack.c.l.b16 %v422
  %v793 = vunpack.c.h.b16 %v422
  %v794 = vunpack.c.l.b16 %v423
  %v795 = vunpack.c.h.b16 %v423
  %v796 = vunpack.c.l.b16 %v424
  %v797 = vunpack.c.h.b16 %v424
  %v798 = vunpack.c.l.b16 %v425
  %v799 = vunpack.c.h.b16 %v425
  %v800 = vunpack.c.l.b16 %v426
  %v801 = vunpack.c.h.b16 %v426
  %v802 = vunpack.c.l.b16 %v427
  %v803 = vunpack.c.h.b16 %v427
  %v804 = vunpack.c.l.b16 %v428
  %v805 = vunpack.c.h.b16 %v428
  %v806 = vunpack.c.l.b16 %v429
  %v807 = vunpack.c.h.b16 %v429
  %v808 = vunpack.c.l.b16 %v430
  %v809 = vunpack.c.h.b16 %v430
  %v810 = vunpack.c.l.b16 %v431
  %v811 = vunpack.c.h.b16 %v431
  %v812 = vunpack.c.l.b16 %v432
  %v813 = vunpack.c.h.b16 %v432
  %v814 = vunpack.c.l.b16 %v433
  %v815 = vunpack.c.h.b16 %v433
  %v816 = vunpack.c.l.b16 %v434
  %v817 = vunpack.c.h.b16 %v434
  %v818 = vunpack.c.l.b16 %v435
  %v819 = vunpack.c.h.b16 %v435
  %v820 = vunpack.c.l.b16 %v436
  %v821 = vunpack.c.h.b16 %v436
  %v822 = vunpack.c.l.b16 %v437
  %v823 = vunpack.c.h.b16 %v437
  %v824 = vunpack.c.l.b16 %v438
  %v825 = vunpack.c.h.b16 %v438
  %v826 = vunpack.c.l.b16 %v439
  %v827 = vunpack.c.h.b16 %v439
  %v828 = vunpack.c.l.b16 %v440
  %v829 = vunpack.c.h.b16 %v440
  %v830 = vunpack.c.l.b16 %v441
  %v831 = vunpack.c.h.b16 %v441
  %v832 = vunpack.c.l.b16 %v442
  %v833 = vunpack.c.h.b16 %v442
  %v834 = vunpack.c.l.b16 %v443
  %v835 = vunpack.c.h.b16 %v443
  %v836 = vunpack.c.l.b16 %v444
  %v837 = vunpack.c.h.b16 %v444
  %v838 = vunpack.c.l.b16 %v445
  %v839 = vunpack.c.h.b16 %v445
  %v840 = vpack.c.b16 %v588, %v584
  %v841 = vpack.c.b16 %v589, %v585
  %v842 = vpack.c.b16 %v590, %v586
  %v843 = vpack.c.b16 %v591, %v587
  %v844 = vpack.c.b16 %v596, %v592
  %v845 = vpack.c.b16 %v597, %v593
  %v846 = vpack.c.b16 %v598, %v594
  %v847 = vpack.c.b16 %v599, %v595
  %v848 = vpack.c.b16 %v604, %v600
  %v849 = vpack.c.b16 %v605, %v601
  %v850 = vpack.c.b16 %v606, %v602
  %v851 = vpack.c.b16 %v607, %v603
  %v852 = vpack.c.b16 %v612, %v608
  %v853 = vpack.c.b16 %v613, %v609
  %v854 = vpack.c.b16 %v614, %v610
  %v855 = vpack.c.b16 %v615, %v611
  %v856 = vpack.c.b16 %v620, %v616
  %v857 = vpack.c.b16 %v621, %v617
  %v858 = vpack.c.b16 %v622, %v618
  %v859 = vpack.c.b16 %v623, %v619
  %v860 = vpack.c.b16 %v628, %v624
  %v861 = vpack.c.b16 %v629, %v625
  %v862 = vpack.c.b16 %v630, %v626
  %v863 = vpack.c.b16 %v631, %v627
  %v864 = vpack.c.b16 %v636, %v632
  %v865 = vpack.c.b16 %v637, %v633
  %v866 = vpack.c.b16 %v638, %v634
  %v867 = vpack.c.b16 %v639, %v635
  %v868 = vpack.c.b16 %v644, %v640
  %v869 = vpack.c.b16 %v645, %v641
  %v870 = vpack.c.b16 %v646, %v642
  %v871 = vpack.c.b16 %v647, %v643
  %v872 = vpack.c.b16 %v652, %v648
  %v873 = vpack.c.b16 %v653, %v649
  %v874 = vpack.c.b16 %v654, %v650
  %v875 = vpack.c.b16 %v655, %v651
  %v876 = vpack.c.b16 %v660, %v656
  %v877 = vpack.c.b16 %v661, %v657
  %v878 = vpack.c.b16 %v662, %v658
  %v879 = vpack.c.b16 %v663, %v659
  %v880 = vpack.c.b16 %v668, %v664
  %v881 = vpack.c.b16 %v669, %v665
  %v882 = vpack.c.b16 %v670, %v666
  %v883 = vpack.c.b16 %v671, %v667
  %v884 = vpack.c.b16 %v676, %v672
  %v885 = vpack.c.b16 %v677, %v673
  %v886 = vpack.c.b16 %v678, %v674
  %v887 = vpack.c.b16 %v679, %v675
  %v888 = vpack.c.b16 %v684, %v680
  %v889 = vpack.c.b16 %v685, %v681
  %v890 = vpack.c.b16 %v686, %v682
  %v891 = vpack.c.b16 %v687, %v683
  %v892 = vpack.c.b16 %v692, %v688
  %v893 = vpack.c.b16 %v693, %v689
  %v894 = vpack.c.b16 %v694, %v690
  %v895 = vpack.c.b16 %v695, %v691
  %v896 = vpack.c.b16 %v700, %v696
  %v897 = vpack.c.b16 %v701, %v697
  %v898 = vpack.c.b16 %v702, %v698
  %v899 = vpack.c.b16 %v703, %v699
  %v900 = vpack.c.b16 %v708, %v704
  %v901 = vpack.c.b16 %v709, %v705
  %v902 = vpack.c.b16 %v710, %v706
  %v903 = vpack.c.b16 %v711, %v707
  %v904 = vpack.c.b16 %v716, %v712
  %v905 = vpack.c.b16 %v717, %v713
  %v906 = vpack.c.b16 %v718, %v714
  %v907 = vpack.c.b16 %v719, %v715
  %v908 = vpack.c.b16 %v724, %v720
  %v909 = vpack.c.b16 %v725, %v721
  %v910 = vpack.c.b16 %v726, %v722
  %v911 = vpack.c.b16 %v727, %v723
  %v912 = vpack.c.b16 %v732, %v728
  %v913 = vpack.c.b16 %v733, %v729
  %v914 = vpack.c.b16 %v734, %v730
  %v915 = vpack.c.b16 %v735, %v731
  %v916 = vpack.c.b16 %v740, %v736
  %v917 = vpack.c.b16 %v741, %v737
  %v918 = vpack.c.b16 %v742, %v738
  %v919 = vpack.c.b16 %v743, %v739
  %v920 = vpack.c.b16 %v748, %v744
  %v921 = vpack.c.b16 %v749, %v745
  %v922 = vpack.c.b16 %v750, %v746
  %v923 = vpack.c.b16 %v751, %v747
  %v924 = vpack.c.b16 %v756, %v752
  %v925 = vpack.c.b16 %v757, %v753
  %v926 = vpack.c.b16 %v758, %v754
  %v927 = vpack.c.b16 %v759, %v755
  %v928 = vpack.c.b16 %v764, %v760
  %v929 = vpack.c.b16 %v765, %v761
  %v930 = vpack.c.b16 %v766, %v762
  %v931 = vpack.c.b16 %v767, %v763
  %v932 = vpack.c.b16 %v772, %v768
  %v933 = vpack.c.b16 %v773, %v769
  %v934 = vpack.c.b16 %v774, %v770
  %v935 = vpack.c.b16 %v775, %v771
  %v936 = vpack.c.b16 %v780, %v776
  %v937 = vpack.c.b16 %v781, %v777
  %v938 = vpack.c.b16 %v782, %v778
  %v939 = vpack.c.b16 %v783, %v779
  %v940 = vpack.c.b16 %v788, %v784
  %v941 = vpack.c.b16 %v789, %v785
  %v942 = vpack.c.b16 %v790, %v786
  %v943 = vpack.c.b16 %v791, %v787
  %v944 = vpack.c.b16 %v796, %v792
  %v945 = vpack.c.b16 %v797, %v793
  %v946 = vpack.c.b16 %v798, %v794
  %v947 = vpack.c.b16 %v799, %v795
  %v948 = vpack.c.b16 %v804, %v800
  %v949 = vpack.c.b16 %v805, %v801
  %v950 = vpack.c.b16 %v806, %v802
  %v951 = vpack.c.b16 %v807, %v803
  %v952 = vpack.c.b16 %v812, %v808
  %v953 = vpack.c.b16 %v813, %v809
  %v954 = vpack.c.b16 %v814, %v810
  %v955 = vpack.c.b16 %v815, %v811
  %v956 = vpack.c.b16 %v820, %v816
  %v957 = vpack.c.b16 %v821, %v817
  %v958 = vpack.c.b16 %v822, %v818
  %v959 = vpack.c.b16 %v823, %v819
  %v960 = vpack.c.b16 %v828, %v824
  %v961 = vpack.c.b16 %v829, %v825
  %v962 = vpack.c.b16 %v830, %v826
  %v963 = vpack.c.b16 %v831, %v827
  %v964 = vpack.c.b16 %v836, %v832
  %v965 = vpack.c.b16 %v837, %v833
  %v966 = vpack.c.b16 %v838, %v834
  %v967 = vpack.c.b16 %v839, %v835
  %1096 = vmatpush.bf16.msra.mxu0 %v868
  %1097 = vmatpush.bf16.msra.mxu0 %v864
  %1098 = vmatpush.bf16.msra.mxu0 %v860
  %1099 = vmatpush.bf16.msra.mxu0 %v856
  %1100 = vmatpush.bf16.msra.mxu0 %v852
  %1101 = vmatpush.bf16.msra.mxu0 %v848
  %1102 = vmatpush.bf16.msra.mxu0 %v844
  %1103 = vmatpush.bf16.msra.mxu0 %v840
  %1104 = vmatmul.bf16.gmra.mxu0 %v314
  %v1105 = vpop.f32.mrf.mxu0
  %v1106 = vadd.f32 %v448, %v1105
  %v1107 = vpop.f32.mrf.mxu0
  %v1108 = vadd.f32 %v448, %v1107
  %1109 = vdwg.mxu0
  %1110 = vmatpush.bf16.msra.mxu0 %v900
  %1111 = vmatpush.bf16.msra.mxu0 %v896
  %1112 = vmatpush.bf16.msra.mxu0 %v892
  %1113 = vmatpush.bf16.msra.mxu0 %v888
  %1114 = vmatpush.bf16.msra.mxu0 %v884
  %1115 = vmatpush.bf16.msra.mxu0 %v880
  %1116 = vmatpush.bf16.msra.mxu0 %v876
  %1117 = vmatpush.bf16.msra.mxu0 %v872
  %1118 = vmatmul.bf16.gmra.mxu0 %v315
  %v1119 = vpop.f32.mrf.mxu0
  %v1120 = vadd.f32 %v1106, %v1119
  %v1121 = vpop.f32.mrf.mxu0
  %v1122 = vadd.f32 %v1108, %v1121
  %1123 = vdwg.mxu0
  %1124 = vmatpush.bf16.msra.mxu0 %v932
  %1125 = vmatpush.bf16.msra.mxu0 %v928
  %1126 = vmatpush.bf16.msra.mxu0 %v924
  %1127 = vmatpush.bf16.msra.mxu0 %v920
  %1128 = vmatpush.bf16.msra.mxu0 %v916
  %1129 = vmatpush.bf16.msra.mxu0 %v912
  %1130 = vmatpush.bf16.msra.mxu0 %v908
  %1131 = vmatpush.bf16.msra.mxu0 %v904
  %1132 = vmatmul.bf16.gmra.mxu0 %v316
  %v1133 = vpop.f32.mrf.mxu0
  %v1134 = vadd.f32 %v1120, %v1133
  %v1135 = vpop.f32.mrf.mxu0
  %v1136 = vadd.f32 %v1122, %v1135
  %1137 = vdwg.mxu0
  %1138 = vmatpush.bf16.msra.mxu0 %v964
  %1139 = vmatpush.bf16.msra.mxu0 %v960
  %1140 = vmatpush.bf16.msra.mxu0 %v956
  %1141 = vmatpush.bf16.msra.mxu0 %v952
  %1142 = vmatpush.bf16.msra.mxu0 %v948
  %1143 = vmatpush.bf16.msra.mxu0 %v944
  %1144 = vmatpush.bf16.msra.mxu0 %v940
  %1145 = vmatpush.bf16.msra.mxu0 %v936
  %1146 = vmatmul.bf16.gmra.mxu0 %v317
  %v1147 = vpop.f32.mrf.mxu0
  %v1148 = vadd.f32 %v1134, %v1147
  %v1149 = vpop.f32.mrf.mxu0
  %v1150 = vadd.f32 %v1136, %v1149
  %1151 = vdwg.mxu0
  %1152 = vmatpush.bf16.msra.mxu0 %v869
  %1153 = vmatpush.bf16.msra.mxu0 %v865
  %1154 = vmatpush.bf16.msra.mxu0 %v861
  %1155 = vmatpush.bf16.msra.mxu0 %v857
  %1156 = vmatpush.bf16.msra.mxu0 %v853
  %1157 = vmatpush.bf16.msra.mxu0 %v849
  %1158 = vmatpush.bf16.msra.mxu0 %v845
  %1159 = vmatpush.bf16.msra.mxu0 %v841
  %1160 = vmatmul.bf16.gmra.mxu0 %v314
  %v1161 = vpop.f32.mrf.mxu0
  %v1162 = vadd.f32 %v449, %v1161
  %v1163 = vpop.f32.mrf.mxu0
  %v1164 = vadd.f32 %v449, %v1163
  %1165 = vdwg.mxu0
  %1166 = vmatpush.bf16.msra.mxu0 %v901
  %1167 = vmatpush.bf16.msra.mxu0 %v897
  %1168 = vmatpush.bf16.msra.mxu0 %v893
  %1169 = vmatpush.bf16.msra.mxu0 %v889
  %1170 = vmatpush.bf16.msra.mxu0 %v885
  %1171 = vmatpush.bf16.msra.mxu0 %v881
  %1172 = vmatpush.bf16.msra.mxu0 %v877
  %1173 = vmatpush.bf16.msra.mxu0 %v873
  %1174 = vmatmul.bf16.gmra.mxu0 %v315
  %v1175 = vpop.f32.mrf.mxu0
  %v1176 = vadd.f32 %v1162, %v1175
  %v1177 = vpop.f32.mrf.mxu0
  %v1178 = vadd.f32 %v1164, %v1177
  %1179 = vdwg.mxu0
  %1180 = vmatpush.bf16.msra.mxu0 %v933
  %1181 = vmatpush.bf16.msra.mxu0 %v929
  %1182 = vmatpush.bf16.msra.mxu0 %v925
  %1183 = vmatpush.bf16.msra.mxu0 %v921
  %1184 = vmatpush.bf16.msra.mxu0 %v917
  %1185 = vmatpush.bf16.msra.mxu0 %v913
  %1186 = vmatpush.bf16.msra.mxu0 %v909
  %1187 = vmatpush.bf16.msra.mxu0 %v905
  %1188 = vmatmul.bf16.gmra.mxu0 %v316
  %v1189 = vpop.f32.mrf.mxu0
  %v1190 = vadd.f32 %v1176, %v1189
  %v1191 = vpop.f32.mrf.mxu0
  %v1192 = vadd.f32 %v1178, %v1191
  %1193 = vdwg.mxu0
  %1194 = vmatpush.bf16.msra.mxu0 %v965
  %1195 = vmatpush.bf16.msra.mxu0 %v961
  %1196 = vmatpush.bf16.msra.mxu0 %v957
  %1197 = vmatpush.bf16.msra.mxu0 %v953
  %1198 = vmatpush.bf16.msra.mxu0 %v949
  %1199 = vmatpush.bf16.msra.mxu0 %v945
  %1200 = vmatpush.bf16.msra.mxu0 %v941
  %1201 = vmatpush.bf16.msra.mxu0 %v937
  %1202 = vmatmul.bf16.gmra.mxu0 %v317
  %v1203 = vpop.f32.mrf.mxu0
  %v1204 = vadd.f32 %v1190, %v1203
  %v1205 = vpop.f32.mrf.mxu0
  %v1206 = vadd.f32 %v1192, %v1205
  %1207 = vdwg.mxu0
  %1208 = vmatpush.bf16.msra.mxu0 %v870
  %1209 = vmatpush.bf16.msra.mxu0 %v866
  %1210 = vmatpush.bf16.msra.mxu0 %v862
  %1211 = vmatpush.bf16.msra.mxu0 %v858
  %1212 = vmatpush.bf16.msra.mxu0 %v854
  %1213 = vmatpush.bf16.msra.mxu0 %v850
  %1214 = vmatpush.bf16.msra.mxu0 %v846
  %1215 = vmatpush.bf16.msra.mxu0 %v842
  %1216 = vmatmul.bf16.gmra.mxu0 %v314
  %v1217 = vpop.f32.mrf.mxu0
  %v1218 = vadd.f32 %v450, %v1217
  %v1219 = vpop.f32.mrf.mxu0
  %v1220 = vadd.f32 %v450, %v1219
  %1221 = vdwg.mxu0
  %1222 = vmatpush.bf16.msra.mxu0 %v902
  %1223 = vmatpush.bf16.msra.mxu0 %v898
  %1224 = vmatpush.bf16.msra.mxu0 %v894
  %1225 = vmatpush.bf16.msra.mxu0 %v890
  %1226 = vmatpush.bf16.msra.mxu0 %v886
  %1227 = vmatpush.bf16.msra.mxu0 %v882
  %1228 = vmatpush.bf16.msra.mxu0 %v878
  %1229 = vmatpush.bf16.msra.mxu0 %v874
  %1230 = vmatmul.bf16.gmra.mxu0 %v315
  %v1231 = vpop.f32.mrf.mxu0
  %v1232 = vadd.f32 %v1218, %v1231
  %v1233 = vpop.f32.mrf.mxu0
  %v1234 = vadd.f32 %v1220, %v1233
  %1235 = vdwg.mxu0
  %1236 = vmatpush.bf16.msra.mxu0 %v934
  %1237 = vmatpush.bf16.msra.mxu0 %v930
  %1238 = vmatpush.bf16.msra.mxu0 %v926
  %1239 = vmatpush.bf16.msra.mxu0 %v922
  %1240 = vmatpush.bf16.msra.mxu0 %v918
  %1241 = vmatpush.bf16.msra.mxu0 %v914
  %1242 = vmatpush.bf16.msra.mxu0 %v910
  %1243 = vmatpush.bf16.msra.mxu0 %v906
  %1244 = vmatmul.bf16.gmra.mxu0 %v316
  %v1245 = vpop.f32.mrf.mxu0
  %v1246 = vadd.f32 %v1232, %v1245
  %v1247 = vpop.f32.mrf.mxu0
  %v1248 = vadd.f32 %v1234, %v1247
  %1249 = vdwg.mxu0
  %1250 = vmatpush.bf16.msra.mxu0 %v966
  %1251 = vmatpush.bf16.msra.mxu0 %v962
  %1252 = vmatpush.bf16.msra.mxu0 %v958
  %1253 = vmatpush.bf16.msra.mxu0 %v954
  %1254 = vmatpush.bf16.msra.mxu0 %v950
  %1255 = vmatpush.bf16.msra.mxu0 %v946
  %1256 = vmatpush.bf16.msra.mxu0 %v942
  %1257 = vmatpush.bf16.msra.mxu0 %v938
  %1258 = vmatmul.bf16.gmra.mxu0 %v317
  %v1259 = vpop.f32.mrf.mxu0
  %v1260 = vadd.f32 %v1246, %v1259
  %v1261 = vpop.f32.mrf.mxu0
  %v1262 = vadd.f32 %v1248, %v1261
  %1263 = vdwg.mxu0
  %1264 = vmatpush.bf16.msra.mxu0 %v871
  %1265 = vmatpush.bf16.msra.mxu0 %v867
  %1266 = vmatpush.bf16.msra.mxu0 %v863
  %1267 = vmatpush.bf16.msra.mxu0 %v859
  %1268 = vmatpush.bf16.msra.mxu0 %v855
  %1269 = vmatpush.bf16.msra.mxu0 %v851
  %1270 = vmatpush.bf16.msra.mxu0 %v847
  %1271 = vmatpush.bf16.msra.mxu0 %v843
  %1272 = vmatmul.bf16.gmra.mxu0 %v314
  %v1273 = vpop.f32.mrf.mxu0
  %v1274 = vadd.f32 %v451, %v1273
  %v1275 = vpop.f32.mrf.mxu0
  %v1276 = vadd.f32 %v451, %v1275
  %1277 = vdwg.mxu0
  %1278 = vmatpush.bf16.msra.mxu0 %v903
  %1279 = vmatpush.bf16.msra.mxu0 %v899
  %1280 = vmatpush.bf16.msra.mxu0 %v895
  %1281 = vmatpush.bf16.msra.mxu0 %v891
  %1282 = vmatpush.bf16.msra.mxu0 %v887
  %1283 = vmatpush.bf16.msra.mxu0 %v883
  %1284 = vmatpush.bf16.msra.mxu0 %v879
  %1285 = vmatpush.bf16.msra.mxu0 %v875
  %1286 = vmatmul.bf16.gmra.mxu0 %v315
  %v1287 = vpop.f32.mrf.mxu0
  %v1288 = vadd.f32 %v1274, %v1287
  %v1289 = vpop.f32.mrf.mxu0
  %v1290 = vadd.f32 %v1276, %v1289
  %1291 = vdwg.mxu0
  %1292 = vmatpush.bf16.msra.mxu0 %v935
  %1293 = vmatpush.bf16.msra.mxu0 %v931
  %1294 = vmatpush.bf16.msra.mxu0 %v927
  %1295 = vmatpush.bf16.msra.mxu0 %v923
  %1296 = vmatpush.bf16.msra.mxu0 %v919
  %1297 = vmatpush.bf16.msra.mxu0 %v915
  %1298 = vmatpush.bf16.msra.mxu0 %v911
  %1299 = vmatpush.bf16.msra.mxu0 %v907
  %1300 = vmatmul.bf16.gmra.mxu0 %v316
  %v1301 = vpop.f32.mrf.mxu0
  %v1302 = vadd.f32 %v1288, %v1301
  %v1303 = vpop.f32.mrf.mxu0
  %v1304 = vadd.f32 %v1290, %v1303
  %1305 = vdwg.mxu0
  %1306 = vmatpush.bf16.msra.mxu0 %v967
  %1307 = vmatpush.bf16.msra.mxu0 %v963
  %1308 = vmatpush.bf16.msra.mxu0 %v959
  %1309 = vmatpush.bf16.msra.mxu0 %v955
  %1310 = vmatpush.bf16.msra.mxu0 %v951
  %1311 = vmatpush.bf16.msra.mxu0 %v947
  %1312 = vmatpush.bf16.msra.mxu0 %v943
  %1313 = vmatpush.bf16.msra.mxu0 %v939
  %1314 = vmatmul.bf16.gmra.mxu0 %v317
  %v1315 = vpop.f32.mrf.mxu0
  %v1316 = vadd.f32 %v1302, %v1315
  %v1317 = vpop.f32.mrf.mxu0
  %v1318 = vadd.f32 %v1304, %v1317
  %1319 = vdwg.mxu0
  %v1320 = vmul.f32 %v1148, 0.2
  %v1321 = vmul.f32 %v1204, 0.2
  %v1322 = vmul.f32 %v1260, 0.2
  %v1323 = vmul.f32 %v1316, 0.2
  %v1324 = vmul.f32 %v1150, 0.2
  %v1325 = vmul.f32 %v1206, 0.2
  %v1326 = vmul.f32 %v1262, 0.2
  %v1327 = vmul.f32 %v1318, 0.2
  %v1328 = vmax.f32 %v1148, %v1320
  %v1329 = vmax.f32 %v1204, %v1321
  %v1330 = vmax.f32 %v1260, %v1322
  %v1331 = vmax.f32 %v1316, %v1323
  %v1332 = vmax.f32 %v1150, %v1324
  %v1333 = vmax.f32 %v1206, %v1325
  %v1334 = vmax.f32 %v1262, %v1326
  %v1335 = vmax.f32 %v1318, %v1327
  %v1336 = vpack.c.bf16 %v1332, %v1328
  %v1337 = vpack.c.bf16 %v1333, %v1329
  %v1338 = vpack.c.bf16 %v1334, %v1330
  %v1339 = vpack.c.bf16 %v1335, %v1331
  %v1340 = vld [vmem:[%s5] sm:$0xf]
  %v1341 = vld [vmem:[%s5 + $0x4] sm:$0xf]
  %v1342 = vld [vmem:[%s5 + $0x8] sm:$0xf]
  %v1343 = vld [vmem:[%s5 + $0xc] sm:$0xf]
  %v1344 = vld [vmem:[%s5 + $0x10] sm:$0xf]
  %v1345 = vld [vmem:[%s5 + $0x14] sm:$0xf]
  %v1346 = vld [vmem:[%s5 + $0x18] sm:$0xf]
  %v1347 = vld [vmem:[%s5 + $0x1c] sm:$0xf]
  %v1348 = vld [vmem:[%s5 + $0x20] sm:$0xf]
  %v1349 = vld [vmem:[%s5 + $0x24] sm:$0xf]
  %v1350 = vld [vmem:[%s5 + $0x28] sm:$0xf]
  %v1351 = vld [vmem:[%s5 + $0x2c] sm:$0xf]
  %v1352 = vld [vmem:[%s5 + $0x30] sm:$0xf]
  %v1353 = vld [vmem:[%s5 + $0x34] sm:$0xf]
  %v1354 = vld [vmem:[%s5 + $0x38] sm:$0xf]
  %v1355 = vld [vmem:[%s5 + $0x3c] sm:$0xf]
  %v1356 = vld [vmem:[%s5 + $0x40] sm:$0xf]
  %v1357 = vld [vmem:[%s5 + $0x44] sm:$0xf]
  %v1358 = vld [vmem:[%s5 + $0x48] sm:$0xf]
  %v1359 = vld [vmem:[%s5 + $0x4c] sm:$0xf]
  %v1360 = vld [vmem:[%s5 + $0x50] sm:$0xf]
  %v1361 = vld [vmem:[%s5 + $0x54] sm:$0xf]
  %v1362 = vld [vmem:[%s5 + $0x58] sm:$0xf]
  %v1363 = vld [vmem:[%s5 + $0x5c] sm:$0xf]
  %v1364 = vld [vmem:[%s5 + $0x60] sm:$0xf]
  %v1365 = vld [vmem:[%s5 + $0x64] sm:$0xf]
  %v1366 = vld [vmem:[%s5 + $0x68] sm:$0xf]
  %v1367 = vld [vmem:[%s5 + $0x6c] sm:$0xf]
  %v1368 = vld [vmem:[%s5 + $0x70] sm:$0xf]
  %v1369 = vld [vmem:[%s5 + $0x74] sm:$0xf]
  %v1370 = vld [vmem:[%s5 + $0x78] sm:$0xf]
  %v1371 = vld [vmem:[%s5 + $0x7c] sm:$0xf]
  %v1372 = vld [vmem:[%s5 + $0x80] sm:$0xf]
  %v1373 = vld [vmem:[%s5 + $0x84] sm:$0xf]
  %v1374 = vld [vmem:[%s5 + $0x88] sm:$0xf]
  %v1375 = vld [vmem:[%s5 + $0x8c] sm:$0xf]
  %v1376 = vld [vmem:[%s5 + $0x90] sm:$0xf]
  %v1377 = vld [vmem:[%s5 + $0x94] sm:$0xf]
  %v1378 = vld [vmem:[%s5 + $0x98] sm:$0xf]
  %v1379 = vld [vmem:[%s5 + $0x9c] sm:$0xf]
  %v1380 = vld [vmem:[%s5 + $0xa0] sm:$0xf]
  %v1381 = vld [vmem:[%s5 + $0xa4] sm:$0xf]
  %v1382 = vld [vmem:[%s5 + $0xa8] sm:$0xf]
  %v1383 = vld [vmem:[%s5 + $0xac] sm:$0xf]
  %v1384 = vld [vmem:[%s5 + $0xb0] sm:$0xf]
  %v1385 = vld [vmem:[%s5 + $0xb4] sm:$0xf]
  %v1386 = vld [vmem:[%s5 + $0xb8] sm:$0xf]
  %v1387 = vld [vmem:[%s5 + $0xbc] sm:$0xf]
  %v1388 = vld [vmem:[%s5 + $0xc0] sm:$0xf]
  %v1389 = vld [vmem:[%s5 + $0xc4] sm:$0xf]
  %v1390 = vld [vmem:[%s5 + $0xc8] sm:$0xf]
  %v1391 = vld [vmem:[%s5 + $0xcc] sm:$0xf]
  %v1392 = vld [vmem:[%s5 + $0xd0] sm:$0xf]
  %v1393 = vld [vmem:[%s5 + $0xd4] sm:$0xf]
  %v1394 = vld [vmem:[%s5 + $0xd8] sm:$0xf]
  %v1395 = vld [vmem:[%s5 + $0xdc] sm:$0xf]
  %v1396 = vld [vmem:[%s5 + $0xe0] sm:$0xf]
  %v1397 = vld [vmem:[%s5 + $0xe4] sm:$0xf]
  %v1398 = vld [vmem:[%s5 + $0xe8] sm:$0xf]
  %v1399 = vld [vmem:[%s5 + $0xec] sm:$0xf]
  %v1400 = vld [vmem:[%s5 + $0xf0] sm:$0xf]
  %v1401 = vld [vmem:[%s5 + $0xf4] sm:$0xf]
  %v1402 = vld [vmem:[%s5 + $0xf8] sm:$0xf]
  %v1403 = vld [vmem:[%s5 + $0xfc] sm:$0xf]
  %v1404 = vld [vmem:[%s6] sm:$0x1]
  %v1406 = vperm.slane %v1404, 0
  %v1472 = vunpack.c.l.b16 %v1340
  %v1473 = vunpack.c.l.b16 %v1341
  %v1474 = vunpack.c.l.b16 %v1342
  %v1475 = vunpack.c.l.b16 %v1343
  %v1476 = vunpack.c.l.b16 %v1344
  %v1477 = vunpack.c.l.b16 %v1345
  %v1478 = vunpack.c.l.b16 %v1346
  %v1479 = vunpack.c.l.b16 %v1347
  %v1480 = vunpack.c.l.b16 %v1348
  %v1481 = vunpack.c.l.b16 %v1349
  %v1482 = vunpack.c.l.b16 %v1350
  %v1483 = vunpack.c.l.b16 %v1351
  %v1484 = vunpack.c.l.b16 %v1352
  %v1485 = vunpack.c.l.b16 %v1353
  %v1486 = vunpack.c.l.b16 %v1354
  %v1487 = vunpack.c.l.b16 %v1355
  %v1488 = vunpack.c.l.b16 %v1356
  %v1489 = vunpack.c.l.b16 %v1357
  %v1490 = vunpack.c.l.b16 %v1358
  %v1491 = vunpack.c.l.b16 %v1359
  %v1492 = vunpack.c.l.b16 %v1360
  %v1493 = vunpack.c.l.b16 %v1361
  %v1494 = vunpack.c.l.b16 %v1362
  %v1495 = vunpack.c.l.b16 %v1363
  %v1496 = vunpack.c.l.b16 %v1364
  %v1497 = vunpack.c.l.b16 %v1365
  %v1498 = vunpack.c.l.b16 %v1366
  %v1499 = vunpack.c.l.b16 %v1367
  %v1500 = vunpack.c.l.b16 %v1368
  %v1501 = vunpack.c.l.b16 %v1369
  %v1502 = vunpack.c.l.b16 %v1370
  %v1503 = vunpack.c.l.b16 %v1371
  %v1504 = vunpack.c.l.b16 %v1372
  %v1505 = vunpack.c.l.b16 %v1373
  %v1506 = vunpack.c.l.b16 %v1374
  %v1507 = vunpack.c.l.b16 %v1375
  %v1508 = vunpack.c.l.b16 %v1376
  %v1509 = vunpack.c.l.b16 %v1377
  %v1510 = vunpack.c.l.b16 %v1378
  %v1511 = vunpack.c.l.b16 %v1379
  %v1512 = vunpack.c.l.b16 %v1380
  %v1513 = vunpack.c.l.b16 %v1381
  %v1514 = vunpack.c.l.b16 %v1382
  %v1515 = vunpack.c.l.b16 %v1383
  %v1516 = vunpack.c.l.b16 %v1384
  %v1517 = vunpack.c.l.b16 %v1385
  %v1518 = vunpack.c.l.b16 %v1386
  %v1519 = vunpack.c.l.b16 %v1387
  %v1520 = vunpack.c.l.b16 %v1388
  %v1521 = vunpack.c.l.b16 %v1389
  %v1522 = vunpack.c.l.b16 %v1390
  %v1523 = vunpack.c.l.b16 %v1391
  %v1524 = vunpack.c.l.b16 %v1392
  %v1525 = vunpack.c.l.b16 %v1393
  %v1526 = vunpack.c.l.b16 %v1394
  %v1527 = vunpack.c.l.b16 %v1395
  %v1528 = vunpack.c.l.b16 %v1396
  %v1529 = vunpack.c.l.b16 %v1397
  %v1530 = vunpack.c.l.b16 %v1398
  %v1531 = vunpack.c.l.b16 %v1399
  %v1532 = vunpack.c.l.b16 %v1400
  %v1533 = vunpack.c.l.b16 %v1401
  %v1534 = vunpack.c.l.b16 %v1402
  %v1535 = vunpack.c.l.b16 %v1403
  %v1536 = vpack.c.b16 %v1473, %v1472
  %v1537 = vpack.c.b16 %v1475, %v1474
  %v1538 = vpack.c.b16 %v1477, %v1476
  %v1539 = vpack.c.b16 %v1479, %v1478
  %v1540 = vpack.c.b16 %v1481, %v1480
  %v1541 = vpack.c.b16 %v1483, %v1482
  %v1542 = vpack.c.b16 %v1485, %v1484
  %v1543 = vpack.c.b16 %v1487, %v1486
  %v1544 = vpack.c.b16 %v1489, %v1488
  %v1545 = vpack.c.b16 %v1491, %v1490
  %v1546 = vpack.c.b16 %v1493, %v1492
  %v1547 = vpack.c.b16 %v1495, %v1494
  %v1548 = vpack.c.b16 %v1497, %v1496
  %v1549 = vpack.c.b16 %v1499, %v1498
  %v1550 = vpack.c.b16 %v1501, %v1500
  %v1551 = vpack.c.b16 %v1503, %v1502
  %v1552 = vpack.c.b16 %v1505, %v1504
  %v1553 = vpack.c.b16 %v1507, %v1506
  %v1554 = vpack.c.b16 %v1509, %v1508
  %v1555 = vpack.c.b16 %v1511, %v1510
  %v1556 = vpack.c.b16 %v1513, %v1512
  %v1557 = vpack.c.b16 %v1515, %v1514
  %v1558 = vpack.c.b16 %v1517, %v1516
  %v1559 = vpack.c.b16 %v1519, %v1518
  %v1560 = vpack.c.b16 %v1521, %v1520
  %v1561 = vpack.c.b16 %v1523, %v1522
  %v1562 = vpack.c.b16 %v1525, %v1524
  %v1563 = vpack.c.b16 %v1527, %v1526
  %v1564 = vpack.c.b16 %v1529, %v1528
  %v1565 = vpack.c.b16 %v1531, %v1530
  %v1566 = vpack.c.b16 %v1533, %v1532
  %v1567 = vpack.c.b16 %v1535, %v1534
  %1600 = vmatpush.bf16.msra.mxu0 %v1543
  %1601 = vmatpush.bf16.msra.mxu0 %v1542
  %1602 = vmatpush.bf16.msra.mxu0 %v1541
  %1603 = vmatpush.bf16.msra.mxu0 %v1540
  %1604 = vmatpush.bf16.msra.mxu0 %v1539
  %1605 = vmatpush.bf16.msra.mxu0 %v1538
  %1606 = vmatpush.bf16.msra.mxu0 %v1537
  %1607 = vmatpush.bf16.msra.mxu0 %v1536
  %1608 = vmatmul.bf16.gmra.mxu0 %v1336
  %v1609 = vpop.f32.mrf.mxu0
  %v1610 = vadd.f32 %v1406, %v1609
  %v1611 = vpop.f32.mrf.mxu0
  %v1612 = vadd.f32 %v1406, %v1611
  %1613 = vdwg.mxu0
  %1614 = vmatpush.bf16.msra.mxu0 %v1551
  %1615 = vmatpush.bf16.msra.mxu0 %v1550
  %1616 = vmatpush.bf16.msra.mxu0 %v1549
  %1617 = vmatpush.bf16.msra.mxu0 %v1548
  %1618 = vmatpush.bf16.msra.mxu0 %v1547
  %1619 = vmatpush.bf16.msra.mxu0 %v1546
  %1620 = vmatpush.bf16.msra.mxu0 %v1545
  %1621 = vmatpush.bf16.msra.mxu0 %v1544
  %1622 = vmatmul.bf16.gmra.mxu0 %v1337
  %v1623 = vpop.f32.mrf.mxu0
  %v1624 = vadd.f32 %v1610, %v1623
  %v1625 = vpop.f32.mrf.mxu0
  %v1626 = vadd.f32 %v1612, %v1625
  %1627 = vdwg.mxu0
  %1628 = vmatpush.bf16.msra.mxu0 %v1559
  %1629 = vmatpush.bf16.msra.mxu0 %v1558
  %1630 = vmatpush.bf16.msra.mxu0 %v1557
  %1631 = vmatpush.bf16.msra.mxu0 %v1556
  %1632 = vmatpush.bf16.msra.mxu0 %v1555
  %1633 = vmatpush.bf16.msra.mxu0 %v1554
  %1634 = vmatpush.bf16.msra.mxu0 %v1553
  %1635 = vmatpush.bf16.msra.mxu0 %v1552
  %1636 = vmatmul.bf16.gmra.mxu0 %v1338
  %v1637 = vpop.f32.mrf.mxu0
  %v1638 = vadd.f32 %v1624, %v1637
  %v1639 = vpop.f32.mrf.mxu0
  %v1640 = vadd.f32 %v1626, %v1639
  %1641 = vdwg.mxu0
  %1642 = vmatpush.bf16.msra.mxu0 %v1567
  %1643 = vmatpush.bf16.msra.mxu0 %v1566
  %1644 = vmatpush.bf16.msra.mxu0 %v1565
  %1645 = vmatpush.bf16.msra.mxu0 %v1564
  %1646 = vmatpush.bf16.msra.mxu0 %v1563
  %1647 = vmatpush.bf16.msra.mxu0 %v1562
  %1648 = vmatpush.bf16.msra.mxu0 %v1561
  %1649 = vmatpush.bf16.msra.mxu0 %v1560
  %1650 = vmatmul.bf16.gmra.mxu0 %v1339
  %v1651 = vpop.f32.mrf.mxu0
  %v1652 = vadd.f32 %v1638, %v1651
  %v1653 = vpop.f32.mrf.mxu0
  %v1654 = vadd.f32 %v1640, %v1653
  %1655 = vdwg.mxu0
  %v1656 = vmul.f32 %v1652, 0.2
  %v1657 = vmul.f32 %v1654, 0.2
  %v1658 = vmax.f32 %v1652, %v1656
  %v1659 = vmax.f32 %v1654, %v1657
  %v1660 = vpack.c.bf16 %v1659, %v1658
  %v1661 = vld [vmem:[%s7] sm:$0xf]
  %v1662 = vld [vmem:[%s7 + $0x4] sm:$0xf]
  %v1663 = vld [vmem:[%s7 + $0x8] sm:$0xf]
  %v1664 = vld [vmem:[%s7 + $0xc] sm:$0xf]
  %v1665 = vld [vmem:[%s7 + $0x10] sm:$0xf]
  %v1666 = vld [vmem:[%s7 + $0x14] sm:$0xf]
  %v1667 = vld [vmem:[%s7 + $0x18] sm:$0xf]
  %v1668 = vld [vmem:[%s7 + $0x1c] sm:$0xf]
  %v1669 = vld [vmem:[%s7 + $0x20] sm:$0xf]
  %v1670 = vld [vmem:[%s7 + $0x24] sm:$0xf]
  %v1671 = vld [vmem:[%s7 + $0x28] sm:$0xf]
  %v1672 = vld [vmem:[%s7 + $0x2c] sm:$0xf]
  %v1673 = vld [vmem:[%s7 + $0x30] sm:$0xf]
  %v1674 = vld [vmem:[%s7 + $0x34] sm:$0xf]
  %v1675 = vld [vmem:[%s7 + $0x38] sm:$0xf]
  %v1676 = vld [vmem:[%s7 + $0x3c] sm:$0xf]
  %v1677 = vld [vmem:[%s8] sm:$0x1]
  %v1679 = vperm.slane %v1677, 0
  %v1697 = vunpack.c.l.b16 %v1661
  %v1698 = vunpack.c.l.b16 %v1662
  %v1699 = vunpack.c.l.b16 %v1663
  %v1700 = vunpack.c.l.b16 %v1664
  %v1701 = vunpack.c.l.b16 %v1665
  %v1702 = vunpack.c.l.b16 %v1666
  %v1703 = vunpack.c.l.b16 %v1667
  %v1704 = vunpack.c.l.b16 %v1668
  %v1705 = vunpack.c.l.b16 %v1669
  %v1706 = vunpack.c.l.b16 %v1670
  %v1707 = vunpack.c.l.b16 %v1671
  %v1708 = vunpack.c.l.b16 %v1672
  %v1709 = vunpack.c.l.b16 %v1673
  %v1710 = vunpack.c.l.b16 %v1674
  %v1711 = vunpack.c.l.b16 %v1675
  %v1712 = vunpack.c.l.b16 %v1676
  %v1713 = vpack.c.b16 %v1698, %v1697
  %v1714 = vpack.c.b16 %v1700, %v1699
  %v1715 = vpack.c.b16 %v1702, %v1701
  %v1716 = vpack.c.b16 %v1704, %v1703
  %v1717 = vpack.c.b16 %v1706, %v1705
  %v1718 = vpack.c.b16 %v1708, %v1707
  %v1719 = vpack.c.b16 %v1710, %v1709
  %v1720 = vpack.c.b16 %v1712, %v1711
  %1729 = vmatpush.bf16.msra.mxu0 %v1720
  %1730 = vmatpush.bf16.msra.mxu0 %v1719
  %1731 = vmatpush.bf16.msra.mxu0 %v1718
  %1732 = vmatpush.bf16.msra.mxu0 %v1717
  %1733 = vmatpush.bf16.msra.mxu0 %v1716
  %1734 = vmatpush.bf16.msra.mxu0 %v1715
  %1735 = vmatpush.bf16.msra.mxu0 %v1714
  %1736 = vmatpush.bf16.msra.mxu0 %v1713
  %1737 = vmatmul.bf16.gmra.mxu0 %v1660
  %v1738 = vpop.f32.mrf.mxu0
  %v1739 = vadd.f32 %v1679, %v1738
  %v1740 = vpop.f32.mrf.mxu0
  %v1741 = vadd.f32 %v1679, %v1740
  %1742 = vdwg.mxu0
  %1743 = vst [vmem:[%s9] sm:$0xff] %v1739
  %1744 = vst [vmem:[%s9 + $0x8] sm:$0xff] %v1741
  // Predicated region
  $region38: #{classifier_forward.1} parent=0 // pred_check
    _
  $region39: #{classifier_forward.1} parent=0 // pred_check_branch
    %1746 = sbr.rel (0) target = $region41
  $region40: #{classifier_forward.1} parent=0 // pred_region
    _
  $region41: #{classifier_forward.1} parent=0 // pred_fallthru
    _
  // Predicated region
  $region42: #{classifier_forward.1} parent=0 // pred_check
    _
  $region43: #{classifier_forward.1} parent=0 // pred_check_branch
    %1748 = sbr.rel (0) target = $region45
  $region44: #{classifier_forward.1} parent=0 // pred_region
    _
  $region45: #{classifier_forward.1} parent=0 // pred_fallthru
    _

</llo_original>
